<compile_context>
chip_gen: v7x
topology: tpu7x:2x2x1
jax: 0.10.0
libtpu: 0.0.40
codegen_flags: <defaults>
</compile_context>

<pallas_src>
import math

import numpy as np
import jax
import jax.numpy as jnp
from jax import lax
from jax.experimental import pallas as pl
from jax.experimental.pallas import tpu as pltpu


def _team_encoder_kernel(x_ref, adj_ref, w1_ref, w2_ref, w3_ref,
                         w_lin1_ref, vec_ref, team_w_ref, out_ref):
  f32 = jnp.float32
  x = x_ref[...]
  adj = adj_ref[...]
  n = x.shape[0]
  h = w1_ref.shape[1]
  k = w3_ref.shape[1]
  d = 2 * h + k
  n_teams = team_w_ref.shape[0]

  def conv(hm, w_ref, b_rel):
    # DenseGraphConv, aggr='add': lin_rel(adj @ h) + lin_root(h).
    # w_ref rows [0:in] = W_rel, [in:2in] = W_root (packed, [in, out] layout).
    c = hm.shape[1]
    agg = jnp.dot(adj, hm, preferred_element_type=f32)
    return (jnp.dot(agg, w_ref[0:c, :], preferred_element_type=f32) + b_rel
            + jnp.dot(hm, w_ref[c:2 * c, :], preferred_element_type=f32))

  def relu_bn(hm, gamma, beta):
    # relu then BatchNorm1d (training mode: batch stats, biased var, eps=1e-5)
    # with the affine folded into one scale/shift; rsqrt runs on the EUP.
    hm = jnp.maximum(hm, 0.0)
    mu = jnp.mean(hm, axis=0, keepdims=True)
    var = jnp.mean((hm - mu) ** 2, axis=0, keepdims=True)
    scale = gamma * lax.rsqrt(var + 1e-5)
    return hm * scale + (beta - mu * scale)

  # vec rows: 0 b_rel1, 1 g1, 2 be1, 3 b_rel2, 4 g2, 5 be2,
  #           6 b_rel3, 7 g3, 8 be3, 9 b_lin1   (K-wide rows zero padded).
  x1 = relu_bn(conv(x, w1_ref, vec_ref[0:1, :h]),
               vec_ref[1:2, :h], vec_ref[2:3, :h])
  x2 = relu_bn(conv(x1, w2_ref, vec_ref[3:4, :h]),
               vec_ref[4:5, :h], vec_ref[5:6, :h])
  x3 = relu_bn(conv(x2, w3_ref, vec_ref[6:7, :k]),
               vec_ref[7:8, :k], vec_ref[8:9, :k])
  b_lin1 = vec_ref[9:10, :k]

  # Single packed output slab: cols [0:d) = emb, [d:d+k) = s1, then
  # norm / e1 / sim / embedding_loss / total_loss in row 0, zero padding.
  out_ref[...] = jnp.zeros_like(out_ref)
  out_ref[:, 0:h] = x1
  out_ref[:, h:2 * h] = x2
  out_ref[:, 2 * h:d] = x3
  emb = out_ref[:, 0:d]   # read the concatenation back once ([N, 66] load)

  # lin1 on the concatenation: one MXU matmul (instead of 3 partials).
  s_logits = jnp.maximum(
      jnp.dot(emb, w_lin1_ref[...], preferred_element_type=f32) + b_lin1, 0.0)

  # softmax over the cluster axis (torch dim=2 with implicit batch dim).
  m = jnp.max(s_logits, axis=-1, keepdims=True)
  e = jnp.exp(s_logits - m)
  s1 = e * pl.reciprocal(jnp.sum(e, axis=-1, keepdims=True), approx=True)
  out_ref[:, d:d + k] = s1

  def matmul_nt(a, b):  # a [M,C] x b [N,C]^T -> [M,N], contracting last dims
    return lax.dot_general(a, b, (((1,), (1,)), ((), ())),
                           preferred_element_type=f32)

  def row_inv_norm(a, eps=1e-8):  # 1 / max(||row||_2, eps), rsqrt on EUP
    sq = jnp.sum(a * a, axis=1, keepdims=True)
    return lax.rsqrt(jnp.maximum(sq, eps * eps))

  # norm = ||s1 @ s1.T - adj||_F
  tmp = matmul_nt(s1, s1) - adj
  norm = jnp.sqrt(jnp.sum(tmp * tmp, keepdims=True))           # (1, 1)

  # e1 = entropy term from dense_diff_pool: it softmaxes s1 *again*.
  m2 = jnp.max(s1, axis=-1, keepdims=True)
  e2 = jnp.exp(s1 - m2)
  s2 = e2 * pl.reciprocal(jnp.sum(e2, axis=-1, keepdims=True), approx=True)
  e1 = jnp.sum(-s2 * jnp.log(s2 + 1e-15), keepdims=True) / n   # (1, 1)

  # sim: only the diagonal of sim_matrix(sim_x_mat, sim_s_mat) is ever used:
  #   diag[i] = <A_i, B_i> / (max(||A_i||, eps) * max(||B_i||, eps))
  x_n = x * row_inv_norm(x)
  s_n = s1 * row_inv_norm(s1)
  a_mat = matmul_nt(x_n, x_n)          # sim_x_mat  [N, N]
  b_mat = matmul_nt(s_n, s_n)          # sim_s_mat  [N, N]
  dot_ab = jnp.sum(a_mat * b_mat, axis=1, keepdims=True)
  diag = dot_ab * row_inv_norm(a_mat) * row_inv_norm(b_mat)
  sim = -jnp.sum(diag, keepdims=True) / n                      # (1, 1)

  # embedding_loss: row i of team_w = mean-weights(replace_i) - mean-weights(remain_i),
  # so one small matmul replaces the per-team gathers/reduces.
  diff = jnp.dot(team_w_ref[...], emb, preferred_element_type=f32)   # [T, D]
  emb_loss = jnp.sum(jnp.abs(diff), keepdims=True) / n_teams         # (1, 1)

  total = 100.0 * norm + 10.0 * e1 + 100.0 * sim + emb_loss

  base = d + k
  out_ref[0:1, base + 0:base + 1] = norm
  out_ref[0:1, base + 1:base + 2] = e1
  out_ref[0:1, base + 2:base + 3] = sim
  out_ref[0:1, base + 3:base + 4] = emb_loss
  out_ref[0:1, base + 4:base + 5] = total


def init_params(key, num_features, hidden, num_clusters):
  ks = jax.random.split(key, 10)
  f32 = jnp.float32

  def w(k, shape, scale=0.1):
    return (scale * jax.random.normal(k, shape)).astype(f32)

  d = 2 * hidden + num_clusters
  vw = max(hidden, num_clusters)

  def row(v):  # pad a (1, c) vector to the shared table width
    return jnp.pad(v, ((0, 0), (0, vw - v.shape[1])))

  vec = jnp.concatenate([
      row(w(ks[7], (1, hidden))),                 # 0: b_rel1
      row(jnp.ones((1, hidden), f32)),            # 1: bn1 gamma
      row(jnp.zeros((1, hidden), f32)),           # 2: bn1 beta
      row(w(ks[8], (1, hidden))),                 # 3: b_rel2
      row(jnp.ones((1, hidden), f32)),            # 4: bn2 gamma
      row(jnp.zeros((1, hidden), f32)),           # 5: bn2 beta
      row(w(ks[9], (1, num_clusters))),           # 6: b_rel3
      row(jnp.ones((1, num_clusters), f32)),      # 7: bn3 gamma
      row(jnp.zeros((1, num_clusters), f32)),     # 8: bn3 beta
      row(jnp.zeros((1, num_clusters), f32)),     # 9: b_lin1
  ], axis=0)

  return dict(
      # conv weights pre-transposed to [in, out], packed [W_rel ; W_root].
      w1=jnp.concatenate([w(ks[0], (num_features, hidden)),
                          w(ks[1], (num_features, hidden))], axis=0),
      w2=jnp.concatenate([w(ks[2], (hidden, hidden)),
                          w(ks[3], (hidden, hidden))], axis=0),
      w3=jnp.concatenate([w(ks[4], (hidden, num_clusters)),
                          w(ks[5], (hidden, num_clusters))], axis=0),
      w_lin1=w(ks[6], (d, num_clusters)),
      vec=vec,
  )


def team_encoder_forward(x, adj, params, sample_teams, sample_replaces):
  n, _ = x.shape
  hidden = params['w1'].shape[1]
  k = params['w3'].shape[1]
  d = 2 * hidden + k

  # Host-side packing of the team averaging weights (Python lists -> one matrix):
  # row i = mean-selector(replace_i) - mean-selector(team_i \ replace_i).
  t = len(sample_teams)
  tw = np.zeros((t, n), dtype=np.float32)
  for i, (team, replace) in enumerate(zip(sample_teams, sample_replaces)):
    remain = sorted(set(team) - set(replace))
    for j in replace:
      tw[i, j] += 1.0 / len(replace)
    for j in remain:
      tw[i, j] -= 1.0 / len(remain)
  team_w = jnp.asarray(tw)

  slab_w = max(128, ((d + k + 5 + 127) // 128) * 128)   # lane-dense output slab

  inputs = [x, adj, params['w1'], params['w2'], params['w3'],
            params['w_lin1'], params['vec'], team_w]
  in_specs = [pl.BlockSpec(a.shape, lambda *_, nd=a.ndim: (0,) * nd)
              for a in inputs]

  slab = pl.pallas_call(
      _team_encoder_kernel,
      out_shape=jax.ShapeDtypeStruct((n, slab_w), jnp.float32),
      grid=(1,),
      in_specs=in_specs,
      out_specs=pl.BlockSpec((n, slab_w), lambda i: (0, 0)),
      compiler_params=pltpu.CompilerParams(dimension_semantics=("arbitrary",)),
  )(*inputs)

  emb = slab[:, :d]
  s1 = slab[:, d:d + k]
  norm = slab[0, d + k + 0]
  e1 = slab[0, d + k + 1]
  sim = slab[0, d + k + 2]
  emb_loss = slab[0, d + k + 3]
  total_loss = slab[0, d + k + 4]

  # match torch shapes: s1 is [1, N, K] (implicit batch), embedding is [N, D].
  return s1[None], norm, e1, sim, total_loss, emb_loss, emb


if __name__ == "__main__":
  key = jax.random.PRNGKey(0)
  k_x, k_adj, k_params = jax.random.split(key, 3)

  # small, module-consistent shapes
  num_nodes = 16          # N (rows of x / adj)
  num_features = 8        # F
  max_nodes = 40          # -> num_clusters = ceil(40 / 20) = 2
  hidden = 32             # GNN hidden_channels (fixed at 32 in TeamEncoder)
  num_clusters = math.ceil(max_nodes / 20)

  x = jax.random.normal(k_x, (num_nodes, num_features), dtype=jnp.float32)
  a = jax.random.uniform(k_adj, (num_nodes, num_nodes))
  adj = ((a + a.T) > 1.0).astype(jnp.float32)

  params = init_params(k_params, num_features, hidden, num_clusters)

  sample_teams = [[0, 1, 2, 3, 4], [5, 6, 7, 8, 9], [10, 11, 12, 13, 14]]
  sample_replaces = [[1, 3], [6], [12, 13]]

  outs = team_encoder_forward(x, adj, params, sample_teams, sample_replaces)
  s1, norm, e1, sim, total_loss, embedding_loss, embedding = outs
  jax.block_until_ready(total_loss)
  jax.block_until_ready(s1)
  jax.block_until_ready(embedding)
  print("KERNEL_OK")
</pallas_src>

<mosaic_0001>
module attributes {stable_mosaic.version = 11 : i64} {
  func.func @_team_encoder_kernel(%arg0: i32, %arg1: memref<16x8xf32, #tpu.memory_space<vmem>>, %arg2: memref<16x16xf32, #tpu.memory_space<vmem>>, %arg3: memref<16x32xf32, #tpu.memory_space<vmem>>, %arg4: memref<64x32xf32, #tpu.memory_space<vmem>>, %arg5: memref<64x2xf32, #tpu.memory_space<vmem>>, %arg6: memref<66x2xf32, #tpu.memory_space<vmem>>, %arg7: memref<10x32xf32, #tpu.memory_space<vmem>>, %arg8: memref<3x16xf32, #tpu.memory_space<vmem>>, %arg9: memref<16x128xf32, #tpu.memory_space<vmem>>) attributes {dimension_semantics = [#tpu.dimension_semantics<arbitrary>], iteration_bounds = array<i64: 1>, scalar_prefetch = 0 : i64, scratch_operands = 0 : i64, tpu.core_type = #tpu.core_type<tc>, window_params = [{pipeline_mode = #tpu.pipeline_mode<synchronous>, transform_indices = @transform_0, window_bounds = array<i64: 16, 8>}, {pipeline_mode = #tpu.pipeline_mode<synchronous>, transform_indices = @transform_1, window_bounds = array<i64: 16, 16>}, {pipeline_mode = #tpu.pipeline_mode<synchronous>, transform_indices = @transform_2, window_bounds = array<i64: 16, 32>}, {pipeline_mode = #tpu.pipeline_mode<synchronous>, transform_indices = @transform_3, window_bounds = array<i64: 64, 32>}, {pipeline_mode = #tpu.pipeline_mode<synchronous>, transform_indices = @transform_4, window_bounds = array<i64: 64, 2>}, {pipeline_mode = #tpu.pipeline_mode<synchronous>, transform_indices = @transform_5, window_bounds = array<i64: 66, 2>}, {pipeline_mode = #tpu.pipeline_mode<synchronous>, transform_indices = @transform_6, window_bounds = array<i64: 10, 32>}, {pipeline_mode = #tpu.pipeline_mode<synchronous>, transform_indices = @transform_7, window_bounds = array<i64: 3, 16>}, {pipeline_mode = #tpu.pipeline_mode<synchronous>, transform_indices = @transform_8, window_bounds = array<i64: 16, 128>}]} {
    %c0 = arith.constant 0 : index
    %c0_0 = arith.constant 0 : index
    %0 = vector.load %arg1[%c0, %c0_0] : memref<16x8xf32, #tpu.memory_space<vmem>>, vector<16x8xf32>
    %c0_1 = arith.constant 0 : index
    %c0_2 = arith.constant 0 : index
    %1 = vector.load %arg2[%c0_1, %c0_2] : memref<16x16xf32, #tpu.memory_space<vmem>>, vector<16x16xf32>
    %c0_3 = arith.constant 0 : index
    %c0_4 = arith.constant 0 : index
    %2 = vector.load %arg7[%c0_3, %c0_4] : memref<10x32xf32, #tpu.memory_space<vmem>>, vector<1x32xf32>
    %cst = arith.constant dense<0.000000e+00> : vector<16x8xf32>
    %3 = tpu.matmul %1, %0, %cst {dimension_numbers = #tpu.dot_dimension_numbers<[1], [0], [0], [1], [0, 0, 1, 1], [], []>} : vector<16x16xf32>, vector<16x8xf32>, vector<16x8xf32> -> vector<16x8xf32>
    %c0_5 = arith.constant 0 : index
    %c0_6 = arith.constant 0 : index
    %4 = vector.load %arg3[%c0_5, %c0_6] : memref<16x32xf32, #tpu.memory_space<vmem>>, vector<8x32xf32>
    %cst_7 = arith.constant dense<0.000000e+00> : vector<16x32xf32>
    %5 = tpu.matmul %3, %4, %cst_7 {dimension_numbers = #tpu.dot_dimension_numbers<[1], [0], [0], [1], [0, 0, 1, 1], [], []>} : vector<16x8xf32>, vector<8x32xf32>, vector<16x32xf32> -> vector<16x32xf32>
    %6 = vector.broadcast %2 : vector<1x32xf32> to vector<16x32xf32>
    %7 = arith.addf %5, %6 : vector<16x32xf32>
    %c8 = arith.constant 8 : index
    %c0_8 = arith.constant 0 : index
    %8 = vector.load %arg3[%c8, %c0_8] : memref<16x32xf32, #tpu.memory_space<vmem>>, vector<8x32xf32>
    %cst_9 = arith.constant dense<0.000000e+00> : vector<16x32xf32>
    %9 = tpu.matmul %0, %8, %cst_9 {dimension_numbers = #tpu.dot_dimension_numbers<[1], [0], [0], [1], [0, 0, 1, 1], [], []>} : vector<16x8xf32>, vector<8x32xf32>, vector<16x32xf32> -> vector<16x32xf32>
    %10 = arith.addf %7, %9 : vector<16x32xf32>
    %c1 = arith.constant 1 : index
    %c0_10 = arith.constant 0 : index
    %11 = vector.load %arg7[%c1, %c0_10] : memref<10x32xf32, #tpu.memory_space<vmem>>, vector<1x32xf32>
    %c2 = arith.constant 2 : index
    %c0_11 = arith.constant 0 : index
    %12 = vector.load %arg7[%c2, %c0_11] : memref<10x32xf32, #tpu.memory_space<vmem>>, vector<1x32xf32>
    %cst_12 = arith.constant 0.000000e+00 : f32
    %13 = vector.broadcast %cst_12 : f32 to vector<16x32xf32>
    %14 = arith.maximumf %10, %13 : vector<16x32xf32>
    %cst_13 = arith.constant dense<0.000000e+00> : vector<32xf32>
    %15 = vector.multi_reduction <add>, %14, %cst_13 [0] : vector<16x32xf32> to vector<32xf32>
    %16 = vector.shape_cast %15 : vector<32xf32> to vector<1x32xf32>
    %cst_14 = arith.constant 1.600000e+01 : f32
    %17 = vector.broadcast %cst_14 : f32 to vector<1x32xf32>
    %18 = arith.divf %16, %17 : vector<1x32xf32>
    %19 = vector.broadcast %18 : vector<1x32xf32> to vector<16x32xf32>
    %20 = arith.subf %14, %19 : vector<16x32xf32>
    %21 = arith.mulf %20, %20 : vector<16x32xf32>
    %cst_15 = arith.constant dense<0.000000e+00> : vector<32xf32>
    %22 = vector.multi_reduction <add>, %21, %cst_15 [0] : vector<16x32xf32> to vector<32xf32>
    %23 = vector.shape_cast %22 : vector<32xf32> to vector<1x32xf32>
    %cst_16 = arith.constant 1.600000e+01 : f32
    %24 = vector.broadcast %cst_16 : f32 to vector<1x32xf32>
    %25 = arith.divf %23, %24 : vector<1x32xf32>
    %cst_17 = arith.constant 9.99999974E-6 : f32
    %26 = vector.broadcast %cst_17 : f32 to vector<1x32xf32>
    %27 = arith.addf %25, %26 : vector<1x32xf32>
    %28 = math.rsqrt %27 : vector<1x32xf32>
    %29 = arith.mulf %11, %28 : vector<1x32xf32>
    %30 = vector.broadcast %29 : vector<1x32xf32> to vector<16x32xf32>
    %31 = arith.mulf %14, %30 : vector<16x32xf32>
    %32 = arith.mulf %18, %29 : vector<1x32xf32>
    %33 = arith.subf %12, %32 : vector<1x32xf32>
    %34 = vector.broadcast %33 : vector<1x32xf32> to vector<16x32xf32>
    %35 = arith.addf %31, %34 : vector<16x32xf32>
    %c3 = arith.constant 3 : index
    %c0_18 = arith.constant 0 : index
    %36 = vector.load %arg7[%c3, %c0_18] : memref<10x32xf32, #tpu.memory_space<vmem>>, vector<1x32xf32>
    %cst_19 = arith.constant dense<0.000000e+00> : vector<16x32xf32>
    %37 = tpu.matmul %1, %35, %cst_19 {dimension_numbers = #tpu.dot_dimension_numbers<[1], [0], [0], [1], [0, 0, 1, 1], [], []>} : vector<16x16xf32>, vector<16x32xf32>, vector<16x32xf32> -> vector<16x32xf32>
    %c0_20 = arith.constant 0 : index
    %c0_21 = arith.constant 0 : index
    %38 = vector.load %arg4[%c0_20, %c0_21] : memref<64x32xf32, #tpu.memory_space<vmem>>, vector<32x32xf32>
    %cst_22 = arith.constant dense<0.000000e+00> : vector<16x32xf32>
    %39 = tpu.matmul %37, %38, %cst_22 {dimension_numbers = #tpu.dot_dimension_numbers<[1], [0], [0], [1], [0, 0, 1, 1], [], []>} : vector<16x32xf32>, vector<32x32xf32>, vector<16x32xf32> -> vector<16x32xf32>
    %40 = vector.broadcast %36 : vector<1x32xf32> to vector<16x32xf32>
    %41 = arith.addf %39, %40 : vector<16x32xf32>
    %c32 = arith.constant 32 : index
    %c0_23 = arith.constant 0 : index
    %42 = vector.load %arg4[%c32, %c0_23] : memref<64x32xf32, #tpu.memory_space<vmem>>, vector<32x32xf32>
    %cst_24 = arith.constant dense<0.000000e+00> : vector<16x32xf32>
    %43 = tpu.matmul %35, %42, %cst_24 {dimension_numbers = #tpu.dot_dimension_numbers<[1], [0], [0], [1], [0, 0, 1, 1], [], []>} : vector<16x32xf32>, vector<32x32xf32>, vector<16x32xf32> -> vector<16x32xf32>
    %44 = arith.addf %41, %43 : vector<16x32xf32>
    %c4 = arith.constant 4 : index
    %c0_25 = arith.constant 0 : index
    %45 = vector.load %arg7[%c4, %c0_25] : memref<10x32xf32, #tpu.memory_space<vmem>>, vector<1x32xf32>
    %c5 = arith.constant 5 : index
    %c0_26 = arith.constant 0 : index
    %46 = vector.load %arg7[%c5, %c0_26] : memref<10x32xf32, #tpu.memory_space<vmem>>, vector<1x32xf32>
    %cst_27 = arith.constant 0.000000e+00 : f32
    %47 = vector.broadcast %cst_27 : f32 to vector<16x32xf32>
    %48 = arith.maximumf %44, %47 : vector<16x32xf32>
    %cst_28 = arith.constant dense<0.000000e+00> : vector<32xf32>
    %49 = vector.multi_reduction <add>, %48, %cst_28 [0] : vector<16x32xf32> to vector<32xf32>
    %50 = vector.shape_cast %49 : vector<32xf32> to vector<1x32xf32>
    %cst_29 = arith.constant 1.600000e+01 : f32
    %51 = vector.broadcast %cst_29 : f32 to vector<1x32xf32>
    %52 = arith.divf %50, %51 : vector<1x32xf32>
    %53 = vector.broadcast %52 : vector<1x32xf32> to vector<16x32xf32>
    %54 = arith.subf %48, %53 : vector<16x32xf32>
    %55 = arith.mulf %54, %54 : vector<16x32xf32>
    %cst_30 = arith.constant dense<0.000000e+00> : vector<32xf32>
    %56 = vector.multi_reduction <add>, %55, %cst_30 [0] : vector<16x32xf32> to vector<32xf32>
    %57 = vector.shape_cast %56 : vector<32xf32> to vector<1x32xf32>
    %cst_31 = arith.constant 1.600000e+01 : f32
    %58 = vector.broadcast %cst_31 : f32 to vector<1x32xf32>
    %59 = arith.divf %57, %58 : vector<1x32xf32>
    %cst_32 = arith.constant 9.99999974E-6 : f32
    %60 = vector.broadcast %cst_32 : f32 to vector<1x32xf32>
    %61 = arith.addf %59, %60 : vector<1x32xf32>
    %62 = math.rsqrt %61 : vector<1x32xf32>
    %63 = arith.mulf %45, %62 : vector<1x32xf32>
    %64 = vector.broadcast %63 : vector<1x32xf32> to vector<16x32xf32>
    %65 = arith.mulf %48, %64 : vector<16x32xf32>
    %66 = arith.mulf %52, %63 : vector<1x32xf32>
    %67 = arith.subf %46, %66 : vector<1x32xf32>
    %68 = vector.broadcast %67 : vector<1x32xf32> to vector<16x32xf32>
    %69 = arith.addf %65, %68 : vector<16x32xf32>
    %c6 = arith.constant 6 : index
    %c0_33 = arith.constant 0 : index
    %70 = vector.load %arg7[%c6, %c0_33] : memref<10x32xf32, #tpu.memory_space<vmem>>, vector<1x2xf32>
    %cst_34 = arith.constant dense<0.000000e+00> : vector<16x32xf32>
    %71 = tpu.matmul %1, %69, %cst_34 {dimension_numbers = #tpu.dot_dimension_numbers<[1], [0], [0], [1], [0, 0, 1, 1], [], []>} : vector<16x16xf32>, vector<16x32xf32>, vector<16x32xf32> -> vector<16x32xf32>
    %c0_35 = arith.constant 0 : index
    %c0_36 = arith.constant 0 : index
    %72 = vector.load %arg5[%c0_35, %c0_36] : memref<64x2xf32, #tpu.memory_space<vmem>>, vector<32x2xf32>
    %cst_37 = arith.constant dense<0.000000e+00> : vector<16x2xf32>
    %73 = tpu.matmul %71, %72, %cst_37 {dimension_numbers = #tpu.dot_dimension_numbers<[1], [0], [0], [1], [0, 0, 1, 1], [], []>} : vector<16x32xf32>, vector<32x2xf32>, vector<16x2xf32> -> vector<16x2xf32>
    %74 = vector.broadcast %70 : vector<1x2xf32> to vector<16x2xf32>
    %75 = arith.addf %73, %74 : vector<16x2xf32>
    %c32_38 = arith.constant 32 : index
    %c0_39 = arith.constant 0 : index
    %76 = vector.load %arg5[%c32_38, %c0_39] : memref<64x2xf32, #tpu.memory_space<vmem>>, vector<32x2xf32>
    %cst_40 = arith.constant dense<0.000000e+00> : vector<16x2xf32>
    %77 = tpu.matmul %69, %76, %cst_40 {dimension_numbers = #tpu.dot_dimension_numbers<[1], [0], [0], [1], [0, 0, 1, 1], [], []>} : vector<16x32xf32>, vector<32x2xf32>, vector<16x2xf32> -> vector<16x2xf32>
    %78 = arith.addf %75, %77 : vector<16x2xf32>
    %c7 = arith.constant 7 : index
    %c0_41 = arith.constant 0 : index
    %79 = vector.load %arg7[%c7, %c0_41] : memref<10x32xf32, #tpu.memory_space<vmem>>, vector<1x2xf32>
    %c8_42 = arith.constant 8 : index
    %c0_43 = arith.constant 0 : index
    %80 = vector.load %arg7[%c8_42, %c0_43] : memref<10x32xf32, #tpu.memory_space<vmem>>, vector<1x2xf32>
    %cst_44 = arith.constant 0.000000e+00 : f32
    %81 = vector.broadcast %cst_44 : f32 to vector<16x2xf32>
    %82 = arith.maximumf %78, %81 : vector<16x2xf32>
    %cst_45 = arith.constant dense<0.000000e+00> : vector<2xf32>
    %83 = vector.multi_reduction <add>, %82, %cst_45 [0] : vector<16x2xf32> to vector<2xf32>
    %84 = vector.shape_cast %83 : vector<2xf32> to vector<1x2xf32>
    %cst_46 = arith.constant 1.600000e+01 : f32
    %85 = vector.broadcast %cst_46 : f32 to vector<1x2xf32>
    %86 = arith.divf %84, %85 : vector<1x2xf32>
    %87 = vector.broadcast %86 : vector<1x2xf32> to vector<16x2xf32>
    %88 = arith.subf %82, %87 : vector<16x2xf32>
    %89 = arith.mulf %88, %88 : vector<16x2xf32>
    %cst_47 = arith.constant dense<0.000000e+00> : vector<2xf32>
    %90 = vector.multi_reduction <add>, %89, %cst_47 [0] : vector<16x2xf32> to vector<2xf32>
    %91 = vector.shape_cast %90 : vector<2xf32> to vector<1x2xf32>
    %cst_48 = arith.constant 1.600000e+01 : f32
    %92 = vector.broadcast %cst_48 : f32 to vector<1x2xf32>
    %93 = arith.divf %91, %92 : vector<1x2xf32>
    %cst_49 = arith.constant 9.99999974E-6 : f32
    %94 = vector.broadcast %cst_49 : f32 to vector<1x2xf32>
    %95 = arith.addf %93, %94 : vector<1x2xf32>
    %96 = math.rsqrt %95 : vector<1x2xf32>
    %97 = arith.mulf %79, %96 : vector<1x2xf32>
    %98 = vector.broadcast %97 : vector<1x2xf32> to vector<16x2xf32>
    %99 = arith.mulf %82, %98 : vector<16x2xf32>
    %100 = arith.mulf %86, %97 : vector<1x2xf32>
    %101 = arith.subf %80, %100 : vector<1x2xf32>
    %102 = vector.broadcast %101 : vector<1x2xf32> to vector<16x2xf32>
    %103 = arith.addf %99, %102 : vector<16x2xf32>
    %c9 = arith.constant 9 : index
    %c0_50 = arith.constant 0 : index
    %104 = vector.load %arg7[%c9, %c0_50] : memref<10x32xf32, #tpu.memory_space<vmem>>, vector<1x2xf32>
    %cst_51 = arith.constant 0.000000e+00 : f32
    %105 = vector.broadcast %cst_51 : f32 to vector<16x128xf32>
    %c0_52 = arith.constant 0 : index
    %c0_53 = arith.constant 0 : index
    %106 = vector.load %arg9[%c0_52, %c0_53] : memref<16x128xf32, #tpu.memory_space<vmem>>, vector<16x128xf32>
    tpu.vector_store %arg9[%c0_52, %c0_53], %105 {strides = array<i32>} : memref<16x128xf32, #tpu.memory_space<vmem>>, vector<16x128xf32>,
    %c0_54 = arith.constant 0 : index
    %c0_55 = arith.constant 0 : index
    %107 = vector.load %arg9[%c0_54, %c0_55] : memref<16x128xf32, #tpu.memory_space<vmem>>, vector<16x32xf32>
    tpu.vector_store %arg9[%c0_54, %c0_55], %35 {strides = array<i32>} : memref<16x128xf32, #tpu.memory_space<vmem>>, vector<16x32xf32>,
    %c0_56 = arith.constant 0 : index
    %c32_57 = arith.constant 32 : index
    %108 = vector.load %arg9[%c0_56, %c32_57] : memref<16x128xf32, #tpu.memory_space<vmem>>, vector<16x32xf32>
    tpu.vector_store %arg9[%c0_56, %c32_57], %69 {strides = array<i32>} : memref<16x128xf32, #tpu.memory_space<vmem>>, vector<16x32xf32>,
    %c0_58 = arith.constant 0 : index
    %c64 = arith.constant 64 : index
    %109 = vector.load %arg9[%c0_58, %c64] : memref<16x128xf32, #tpu.memory_space<vmem>>, vector<16x2xf32>
    tpu.vector_store %arg9[%c0_58, %c64], %103 {strides = array<i32>} : memref<16x128xf32, #tpu.memory_space<vmem>>, vector<16x2xf32>,
    %c0_59 = arith.constant 0 : index
    %c0_60 = arith.constant 0 : index
    %110 = vector.load %arg9[%c0_59, %c0_60] : memref<16x128xf32, #tpu.memory_space<vmem>>, vector<16x66xf32>
    %c0_61 = arith.constant 0 : index
    %c0_62 = arith.constant 0 : index
    %111 = vector.load %arg6[%c0_61, %c0_62] : memref<66x2xf32, #tpu.memory_space<vmem>>, vector<66x2xf32>
    %cst_63 = arith.constant dense<0.000000e+00> : vector<16x2xf32>
    %112 = tpu.matmul %110, %111, %cst_63 {dimension_numbers = #tpu.dot_dimension_numbers<[1], [0], [0], [1], [0, 0, 1, 1], [], []>} : vector<16x66xf32>, vector<66x2xf32>, vector<16x2xf32> -> vector<16x2xf32>
    %113 = vector.broadcast %104 : vector<1x2xf32> to vector<16x2xf32>
    %114 = arith.addf %112, %113 : vector<16x2xf32>
    %cst_64 = arith.constant 0.000000e+00 : f32
    %115 = vector.broadcast %cst_64 : f32 to vector<16x2xf32>
    %116 = arith.maximumf %114, %115 : vector<16x2xf32>
    %cst_65 = arith.constant dense<0xFF800000> : vector<16xf32>
    %117 = vector.multi_reduction <maximumf>, %116, %cst_65 [1] : vector<16x2xf32> to vector<16xf32>
    %118 = vector.shape_cast %117 : vector<16xf32> to vector<16x1xf32>
    %119 = vector.broadcast %118 : vector<16x1xf32> to vector<16x2xf32>
    %120 = arith.subf %116, %119 : vector<16x2xf32>
    %121 = math.exp %120 : vector<16x2xf32>
    %cst_66 = arith.constant dense<0.000000e+00> : vector<16xf32>
    %122 = vector.multi_reduction <add>, %121, %cst_66 [1] : vector<16x2xf32> to vector<16xf32>
    %123 = vector.shape_cast %122 : vector<16xf32> to vector<16x1xf32>
    %124 = tpu.reciprocal %123 {approx = true} : vector<16x1xf32> -> vector<16x1xf32>
    %125 = vector.broadcast %124 : vector<16x1xf32> to vector<16x2xf32>
    %126 = arith.mulf %121, %125 : vector<16x2xf32>
    %c0_67 = arith.constant 0 : index
    %c66 = arith.constant 66 : index
    %127 = vector.load %arg9[%c0_67, %c66] : memref<16x128xf32, #tpu.memory_space<vmem>>, vector<16x2xf32>
    tpu.vector_store %arg9[%c0_67, %c66], %126 {strides = array<i32>} : memref<16x128xf32, #tpu.memory_space<vmem>>, vector<16x2xf32>,
    %cst_68 = arith.constant dense<0.000000e+00> : vector<16x16xf32>
    %128 = tpu.matmul %126, %126, %cst_68 {dimension_numbers = #tpu.dot_dimension_numbers<[1], [1], [0], [0], [0, 0, 1, 0], [], []>} : vector<16x2xf32>, vector<16x2xf32>, vector<16x16xf32> -> vector<16x16xf32>
    %129 = arith.subf %128, %1 : vector<16x16xf32>
    %130 = arith.mulf %129, %129 : vector<16x16xf32>
    %131 = vector.shape_cast %130 : vector<16x16xf32> to vector<1x16x16xf32>
    %cst_69 = arith.constant dense<0.000000e+00> : vector<1xf32>
    %132 = vector.multi_reduction <add>, %131, %cst_69 [1, 2] : vector<1x16x16xf32> to vector<1xf32>
    %133 = vector.shape_cast %132 : vector<1xf32> to vector<1x1x1xf32>
    %134 = vector.extract %133[0, 0, 0] : f32 from vector<1x1x1xf32>
    %135 = vector.broadcast %134 : f32 to vector<1x1xf32>
    %136 = math.sqrt %135 : vector<1x1xf32>
    %cst_70 = arith.constant dense<0xFF800000> : vector<16xf32>
    %137 = vector.multi_reduction <maximumf>, %126, %cst_70 [1] : vector<16x2xf32> to vector<16xf32>
    %138 = vector.shape_cast %137 : vector<16xf32> to vector<16x1xf32>
    %139 = vector.broadcast %138 : vector<16x1xf32> to vector<16x2xf32>
    %140 = arith.subf %126, %139 : vector<16x2xf32>
    %141 = math.exp %140 : vector<16x2xf32>
    %cst_71 = arith.constant dense<0.000000e+00> : vector<16xf32>
    %142 = vector.multi_reduction <add>, %141, %cst_71 [1] : vector<16x2xf32> to vector<16xf32>
    %143 = vector.shape_cast %142 : vector<16xf32> to vector<16x1xf32>
    %144 = tpu.reciprocal %143 {approx = true} : vector<16x1xf32> -> vector<16x1xf32>
    %145 = vector.broadcast %144 : vector<16x1xf32> to vector<16x2xf32>
    %146 = arith.mulf %141, %145 : vector<16x2xf32>
    %cst_72 = arith.constant 0.000000e+00 : f32
    %147 = vector.broadcast %cst_72 : f32 to vector<16x2xf32>
    %148 = arith.subf %147, %146 : vector<16x2xf32>
    %cst_73 = arith.constant 1.000000e-15 : f32
    %149 = vector.broadcast %cst_73 : f32 to vector<16x2xf32>
    %150 = arith.addf %146, %149 : vector<16x2xf32>
    %151 = math.log %150 : vector<16x2xf32>
    %152 = arith.mulf %148, %151 : vector<16x2xf32>
    %153 = vector.shape_cast %152 : vector<16x2xf32> to vector<1x16x2xf32>
    %cst_74 = arith.constant dense<0.000000e+00> : vector<1xf32>
    %154 = vector.multi_reduction <add>, %153, %cst_74 [1, 2] : vector<1x16x2xf32> to vector<1xf32>
    %155 = vector.shape_cast %154 : vector<1xf32> to vector<1x1x1xf32>
    %156 = vector.extract %155[0, 0, 0] : f32 from vector<1x1x1xf32>
    %157 = vector.broadcast %156 : f32 to vector<1x1xf32>
    %cst_75 = arith.constant 1.600000e+01 : f32
    %158 = vector.broadcast %cst_75 : f32 to vector<1x1xf32>
    %159 = arith.divf %157, %158 : vector<1x1xf32>
    %160 = arith.mulf %0, %0 : vector<16x8xf32>
    %cst_76 = arith.constant dense<0.000000e+00> : vector<16xf32>
    %161 = vector.multi_reduction <add>, %160, %cst_76 [1] : vector<16x8xf32> to vector<16xf32>
    %162 = vector.shape_cast %161 : vector<16xf32> to vector<16x1xf32>
    %cst_77 = arith.constant 1.000000e-16 : f32
    %163 = vector.broadcast %cst_77 : f32 to vector<16x1xf32>
    %164 = arith.maximumf %162, %163 : vector<16x1xf32>
    %165 = math.rsqrt %164 : vector<16x1xf32>
    %166 = vector.broadcast %165 : vector<16x1xf32> to vector<16x8xf32>
    %167 = arith.mulf %0, %166 : vector<16x8xf32>
    %168 = arith.mulf %126, %126 : vector<16x2xf32>
    %cst_78 = arith.constant dense<0.000000e+00> : vector<16xf32>
    %169 = vector.multi_reduction <add>, %168, %cst_78 [1] : vector<16x2xf32> to vector<16xf32>
    %170 = vector.shape_cast %169 : vector<16xf32> to vector<16x1xf32>
    %cst_79 = arith.constant 1.000000e-16 : f32
    %171 = vector.broadcast %cst_79 : f32 to vector<16x1xf32>
    %172 = arith.maximumf %170, %171 : vector<16x1xf32>
    %173 = math.rsqrt %172 : vector<16x1xf32>
    %174 = vector.broadcast %173 : vector<16x1xf32> to vector<16x2xf32>
    %175 = arith.mulf %126, %174 : vector<16x2xf32>
    %cst_80 = arith.constant dense<0.000000e+00> : vector<16x16xf32>
    %176 = tpu.matmul %167, %167, %cst_80 {dimension_numbers = #tpu.dot_dimension_numbers<[1], [1], [0], [0], [0, 0, 1, 0], [], []>} : vector<16x8xf32>, vector<16x8xf32>, vector<16x16xf32> -> vector<16x16xf32>
    %cst_81 = arith.constant dense<0.000000e+00> : vector<16x16xf32>
    %177 = tpu.matmul %175, %175, %cst_81 {dimension_numbers = #tpu.dot_dimension_numbers<[1], [1], [0], [0], [0, 0, 1, 0], [], []>} : vector<16x2xf32>, vector<16x2xf32>, vector<16x16xf32> -> vector<16x16xf32>
    %178 = arith.mulf %176, %177 : vector<16x16xf32>
    %cst_82 = arith.constant dense<0.000000e+00> : vector<16xf32>
    %179 = vector.multi_reduction <add>, %178, %cst_82 [1] : vector<16x16xf32> to vector<16xf32>
    %180 = vector.shape_cast %179 : vector<16xf32> to vector<16x1xf32>
    %181 = arith.mulf %176, %176 : vector<16x16xf32>
    %cst_83 = arith.constant dense<0.000000e+00> : vector<16xf32>
    %182 = vector.multi_reduction <add>, %181, %cst_83 [1] : vector<16x16xf32> to vector<16xf32>
    %183 = vector.shape_cast %182 : vector<16xf32> to vector<16x1xf32>
    %cst_84 = arith.constant 1.000000e-16 : f32
    %184 = vector.broadcast %cst_84 : f32 to vector<16x1xf32>
    %185 = arith.maximumf %183, %184 : vector<16x1xf32>
    %186 = math.rsqrt %185 : vector<16x1xf32>
    %187 = arith.mulf %180, %186 : vector<16x1xf32>
    %188 = arith.mulf %177, %177 : vector<16x16xf32>
    %cst_85 = arith.constant dense<0.000000e+00> : vector<16xf32>
    %189 = vector.multi_reduction <add>, %188, %cst_85 [1] : vector<16x16xf32> to vector<16xf32>
    %190 = vector.shape_cast %189 : vector<16xf32> to vector<16x1xf32>
    %cst_86 = arith.constant 1.000000e-16 : f32
    %191 = vector.broadcast %cst_86 : f32 to vector<16x1xf32>
    %192 = arith.maximumf %190, %191 : vector<16x1xf32>
    %193 = math.rsqrt %192 : vector<16x1xf32>
    %194 = arith.mulf %187, %193 : vector<16x1xf32>
    %195 = vector.shape_cast %194 : vector<16x1xf32> to vector<1x16x1xf32>
    %cst_87 = arith.constant dense<0.000000e+00> : vector<1xf32>
    %196 = vector.multi_reduction <add>, %195, %cst_87 [1, 2] : vector<1x16x1xf32> to vector<1xf32>
    %197 = vector.shape_cast %196 : vector<1xf32> to vector<1x1x1xf32>
    %198 = vector.extract %197[0, 0, 0] : f32 from vector<1x1x1xf32>
    %199 = vector.broadcast %198 : f32 to vector<1x1xf32>
    %cst_88 = arith.constant 0.000000e+00 : f32
    %200 = vector.broadcast %cst_88 : f32 to vector<1x1xf32>
    %201 = arith.subf %200, %199 : vector<1x1xf32>
    %cst_89 = arith.constant 1.600000e+01 : f32
    %202 = vector.broadcast %cst_89 : f32 to vector<1x1xf32>
    %203 = arith.divf %201, %202 : vector<1x1xf32>
    %c0_90 = arith.constant 0 : index
    %c0_91 = arith.constant 0 : index
    %204 = vector.load %arg8[%c0_90, %c0_91] : memref<3x16xf32, #tpu.memory_space<vmem>>, vector<3x16xf32>
    %cst_92 = arith.constant dense<0.000000e+00> : vector<3x66xf32>
    %205 = tpu.matmul %204, %110, %cst_92 {dimension_numbers = #tpu.dot_dimension_numbers<[1], [0], [0], [1], [0, 0, 1, 1], [], []>} : vector<3x16xf32>, vector<16x66xf32>, vector<3x66xf32> -> vector<3x66xf32>
    %206 = math.absf %205 : vector<3x66xf32>
    %207 = vector.shape_cast %206 : vector<3x66xf32> to vector<1x3x66xf32>
    %cst_93 = arith.constant dense<0.000000e+00> : vector<1xf32>
    %208 = vector.multi_reduction <add>, %207, %cst_93 [1, 2] : vector<1x3x66xf32> to vector<1xf32>
    %209 = vector.shape_cast %208 : vector<1xf32> to vector<1x1x1xf32>
    %210 = vector.extract %209[0, 0, 0] : f32 from vector<1x1x1xf32>
    %211 = vector.broadcast %210 : f32 to vector<1x1xf32>
    %cst_94 = arith.constant 3.000000e+00 : f32
    %212 = vector.broadcast %cst_94 : f32 to vector<1x1xf32>
    %213 = arith.divf %211, %212 : vector<1x1xf32>
    %cst_95 = arith.constant 1.000000e+02 : f32
    %214 = vector.broadcast %cst_95 : f32 to vector<1x1xf32>
    %215 = arith.mulf %214, %136 : vector<1x1xf32>
    %cst_96 = arith.constant 1.000000e+01 : f32
    %216 = vector.broadcast %cst_96 : f32 to vector<1x1xf32>
    %217 = arith.mulf %216, %159 : vector<1x1xf32>
    %218 = arith.addf %215, %217 : vector<1x1xf32>
    %cst_97 = arith.constant 1.000000e+02 : f32
    %219 = vector.broadcast %cst_97 : f32 to vector<1x1xf32>
    %220 = arith.mulf %219, %203 : vector<1x1xf32>
    %221 = arith.addf %218, %220 : vector<1x1xf32>
    %222 = arith.addf %221, %213 : vector<1x1xf32>
    %c0_98 = arith.constant 0 : index
    %c68 = arith.constant 68 : index
    %223 = vector.load %arg9[%c0_98, %c68] : memref<16x128xf32, #tpu.memory_space<vmem>>, vector<1x1xf32>
    tpu.vector_store %arg9[%c0_98, %c68], %136 {strides = array<i32>} : memref<16x128xf32, #tpu.memory_space<vmem>>, vector<1x1xf32>,
    %c0_99 = arith.constant 0 : index
    %c69 = arith.constant 69 : index
    %224 = vector.load %arg9[%c0_99, %c69] : memref<16x128xf32, #tpu.memory_space<vmem>>, vector<1x1xf32>
    tpu.vector_store %arg9[%c0_99, %c69], %159 {strides = array<i32>} : memref<16x128xf32, #tpu.memory_space<vmem>>, vector<1x1xf32>,
    %c0_100 = arith.constant 0 : index
    %c70 = arith.constant 70 : index
    %225 = vector.load %arg9[%c0_100, %c70] : memref<16x128xf32, #tpu.memory_space<vmem>>, vector<1x1xf32>
    tpu.vector_store %arg9[%c0_100, %c70], %203 {strides = array<i32>} : memref<16x128xf32, #tpu.memory_space<vmem>>, vector<1x1xf32>,
    %c0_101 = arith.constant 0 : index
    %c71 = arith.constant 71 : index
    %226 = vector.load %arg9[%c0_101, %c71] : memref<16x128xf32, #tpu.memory_space<vmem>>, vector<1x1xf32>
    tpu.vector_store %arg9[%c0_101, %c71], %213 {strides = array<i32>} : memref<16x128xf32, #tpu.memory_space<vmem>>, vector<1x1xf32>,
    %c0_102 = arith.constant 0 : index
    %c72 = arith.constant 72 : index
    %227 = vector.load %arg9[%c0_102, %c72] : memref<16x128xf32, #tpu.memory_space<vmem>>, vector<1x1xf32>
    tpu.vector_store %arg9[%c0_102, %c72], %222 {strides = array<i32>} : memref<16x128xf32, #tpu.memory_space<vmem>>, vector<1x1xf32>,
    return
  }
  func.func @transform_0(%arg0: i32) -> (i32, i32) {
    %c0_i32 = arith.constant 0 : i32
    %c0_i32_0 = arith.constant 0 : i32
    %c0_i32_1 = arith.constant 0 : i32
    return %c0_i32, %c0_i32_0 : i32, i32
  }
  func.func @transform_1(%arg0: i32) -> (i32, i32) {
    %c0_i32 = arith.constant 0 : i32
    %c0_i32_0 = arith.constant 0 : i32
    %c0_i32_1 = arith.constant 0 : i32
    return %c0_i32, %c0_i32_0 : i32, i32
  }
  func.func @transform_2(%arg0: i32) -> (i32, i32) {
    %c0_i32 = arith.constant 0 : i32
    %c0_i32_0 = arith.constant 0 : i32
    %c0_i32_1 = arith.constant 0 : i32
    return %c0_i32, %c0_i32_0 : i32, i32
  }
  func.func @transform_3(%arg0: i32) -> (i32, i32) {
    %c0_i32 = arith.constant 0 : i32
    %c0_i32_0 = arith.constant 0 : i32
    %c0_i32_1 = arith.constant 0 : i32
    return %c0_i32, %c0_i32_0 : i32, i32
  }
  func.func @transform_4(%arg0: i32) -> (i32, i32) {
    %c0_i32 = arith.constant 0 : i32
    %c0_i32_0 = arith.constant 0 : i32
    %c0_i32_1 = arith.constant 0 : i32
    return %c0_i32, %c0_i32_0 : i32, i32
  }
  func.func @transform_5(%arg0: i32) -> (i32, i32) {
    %c0_i32 = arith.constant 0 : i32
    %c0_i32_0 = arith.constant 0 : i32
    %c0_i32_1 = arith.constant 0 : i32
    return %c0_i32, %c0_i32_0 : i32, i32
  }
  func.func @transform_6(%arg0: i32) -> (i32, i32) {
    %c0_i32 = arith.constant 0 : i32
    %c0_i32_0 = arith.constant 0 : i32
    %c0_i32_1 = arith.constant 0 : i32
    return %c0_i32, %c0_i32_0 : i32, i32
  }
  func.func @transform_7(%arg0: i32) -> (i32, i32) {
    %c0_i32 = arith.constant 0 : i32
    %c0_i32_0 = arith.constant 0 : i32
    %c0_i32_1 = arith.constant 0 : i32
    return %c0_i32, %c0_i32_0 : i32, i32
  }
  func.func @transform_8(%arg0: i32) -> (i32, i32) {
    %c0_i32 = arith.constant 0 : i32
    %c0_i32_0 = arith.constant 0 : i32
    %c0_i32_1 = arith.constant 0 : i32
    return %c0_i32, %c0_i32_0 : i32, i32
  }
}

</mosaic_0001>

<llo_original>
// kernel: tpu_custom_call.1
$region0: #{tpu_custom_call.1}
  #allocation0 [shape = 'u32[]', space=smem, size = 0x4, offset = 0x4, fixed_abs, tag = 'smem constant byte address 0x4 - core index']
  #allocation1 [shape = 'u32[144,128]{1,0:T(1,128)}', space=vmem, size = 0x12000, scoped, tag = 'internal scratch']
  %s0 = inlined_call_operand.vmem [shape: f32[16,8], index: 0, kind: input, shape index: {}]
  %s1 = inlined_call_operand.vmem [shape: f32[16,16], index: 1, kind: input, shape index: {}]
  %s2 = inlined_call_operand.vmem [shape: f32[16,32], index: 2, kind: input, shape index: {}]
  %s3 = inlined_call_operand.vmem [shape: f32[64,32], index: 3, kind: input, shape index: {}]
  %s4 = inlined_call_operand.vmem [shape: f32[64,2], index: 4, kind: input, shape index: {}]
  %s5 = inlined_call_operand.vmem [shape: f32[66,2], index: 5, kind: input, shape index: {}]
  %s6 = inlined_call_operand.vmem [shape: f32[10,32], index: 6, kind: input, shape index: {}]
  %s7 = inlined_call_operand.vmem [shape: f32[3,16], index: 7, kind: input, shape index: {}]
  %s8 = inlined_call_operand.hbm [shape: f32[16,128], index: 8, kind: output, shape index: {}]
  %s9 = sld [smem:[#allocation0]]
  $region42: #{tpu_custom_call.1} parent=0
    _
  %s11 = ssub.s32 1, %s9
  %s12 = scalar_select 0, %s11, %s9
  $region1: #{tpu_custom_call.1} parent=0
    #allocation2 [shape = 'u8[8192]{0}', space=vmem, size = 0x2000, scoped, tag = 'output window, operand 0, single buffered']
    #allocation3 [shape = 's32[1]{0}', space=sflag, size = 0x4, scoped, tag = 'scoped memory for tpu_custom_call.1']
    %13 = vsyncpa [#allocation3], 0
    // Predicated region
    $region2: #{tpu_custom_call.1} parent=1 // pred_check
      _
    $region3: #{tpu_custom_call.1} parent=1 // pred_check_branch
      %15 = sbr.rel (0) target = $region5
    $region4: #{tpu_custom_call.1} parent=1 // pred_region
      _
    $region5: #{tpu_custom_call.1} parent=1 // pred_fallthru
      _
    // Predicated region
    $region6: #{tpu_custom_call.1} parent=1 // pred_check
      _
    $region7: #{tpu_custom_call.1} parent=1 // pred_check_branch
      %17 = sbr.rel (0) target = $region9
    $region8: #{tpu_custom_call.1} parent=1 // pred_region
      _
    $region9: #{tpu_custom_call.1} parent=1 // pred_fallthru
      _
    // Predicated region
    $region10: #{tpu_custom_call.1} parent=1 // pred_check
      _
    $region11: #{tpu_custom_call.1} parent=1 // pred_check_branch
      %19 = sbr.rel (0) target = $region13
    $region12: #{tpu_custom_call.1} parent=1 // pred_region
      _
    $region13: #{tpu_custom_call.1} parent=1 // pred_fallthru
      _
    // Predicated region
    $region14: #{tpu_custom_call.1} parent=1 // pred_check
      _
    $region15: #{tpu_custom_call.1} parent=1 // pred_check_branch
      %21 = sbr.rel (0) target = $region17
    $region16: #{tpu_custom_call.1} parent=1 // pred_region
      _
    $region17: #{tpu_custom_call.1} parent=1 // pred_fallthru
      _
    // Predicated region
    $region18: #{tpu_custom_call.1} parent=1 // pred_check
      _
    $region19: #{tpu_custom_call.1} parent=1 // pred_check_branch
      %23 = sbr.rel (0) target = $region21
    $region20: #{tpu_custom_call.1} parent=1 // pred_region
      _
    $region21: #{tpu_custom_call.1} parent=1 // pred_fallthru
      _
    // Predicated region
    $region22: #{tpu_custom_call.1} parent=1 // pred_check
      _
    $region23: #{tpu_custom_call.1} parent=1 // pred_check_branch
      %25 = sbr.rel (0) target = $region25
    $region24: #{tpu_custom_call.1} parent=1 // pred_region
      _
    $region25: #{tpu_custom_call.1} parent=1 // pred_fallthru
      _
    // Predicated region
    $region26: #{tpu_custom_call.1} parent=1 // pred_check
      _
    $region27: #{tpu_custom_call.1} parent=1 // pred_check_branch
      %27 = sbr.rel (0) target = $region29
    $region28: #{tpu_custom_call.1} parent=1 // pred_region
      _
    $region29: #{tpu_custom_call.1} parent=1 // pred_fallthru
      _
    // Predicated region
    $region30: #{tpu_custom_call.1} parent=1 // pred_check
      _
    $region31: #{tpu_custom_call.1} parent=1 // pred_check_branch
      %29 = sbr.rel (0) target = $region33
    $region32: #{tpu_custom_call.1} parent=1 // pred_region
      _
    $region33: #{tpu_custom_call.1} parent=1 // pred_fallthru
      _
    %v30 = vld [vmem:[%s0] sm:$0xff]
    %v31 = vld [vmem:[%s0 + $0x8] sm:$0xff]
    %v32 = vld [vmem:[%s1] sm:$0xff]
    %v33 = vld [vmem:[%s1 + $0x8] sm:$0xff]
    %v34 = vld [vmem:[%s6] sm:$0x1]
    %vm35 = vcmask 130048
    %v37 = vsel %vm35, %v32, 0
    %v40 = vsel %vm35, %v33, 0
    %42 = vmatprep.subr.mxu0 0.0
    %43 = vmatpush1.msra.mxu0 %v30
    %44 = vmatprep.subr.mxu0 0.0
    %45 = vmatpush1.msra.mxu0 %v31
    %46 = vmatprep.subr.mxu0 0.0
    %47 = vmatpush1.msra.mxu0 0.0
    %48 = vmatprep.subr.mxu0 0.0
    %49 = vmatpush1.msra.mxu0 0.0
    %50 = vmatprep.subr.mxu0 0.0
    %51 = vmatpush1.msra.mxu0 0.0
    %52 = vmatprep.subr.mxu0 0.0
    %53 = vmatpush1.msra.mxu0 0.0
    %54 = vmatprep.subr.mxu0 0.0
    %55 = vmatpush1.msra.mxu0 0.0
    %56 = vmatprep.subr.mxu0 0.0
    %57 = vmatpush1.msra.mxu0 0.0
    %58 = vmatprep.subr.mxu0 0.0
    %59 = vmatpush1.msra.mxu0 0.0
    %60 = vmatprep.subr.mxu0 0.0
    %61 = vmatpush1.msra.mxu0 0.0
    %62 = vmatprep.subr.mxu0 0.0
    %63 = vmatpush1.msra.mxu0 0.0
    %64 = vmatprep.subr.mxu0 0.0
    %65 = vmatpush1.msra.mxu0 0.0
    %66 = vmatprep.subr.mxu0 0.0
    %67 = vmatpush1.msra.mxu0 0.0
    %68 = vmatprep.subr.mxu0 0.0
    %69 = vmatpush1.msra.mxu0 0.0
    %70 = vmatprep.subr.mxu0 0.0
    %71 = vmatpush1.msra.mxu0 0.0
    %72 = vmatprep.subr.mxu0 0.0
    %73 = vmatpush1.msra.mxu0 0.0
    %74 = vmatprep.subr.mxu0 0.0
    %75 = vmatpush1.msra.mxu0 0.0
    %76 = vmatprep.subr.mxu0 0.0
    %77 = vmatpush1.msra.mxu0 0.0
    %78 = vmatprep.subr.mxu0 0.0
    %79 = vmatpush1.msra.mxu0 0.0
    %80 = vmatprep.subr.mxu0 0.0
    %81 = vmatpush1.msra.mxu0 0.0
    %82 = vmatprep.subr.mxu0 0.0
    %83 = vmatpush1.msra.mxu0 0.0
    %84 = vmatprep.subr.mxu0 0.0
    %85 = vmatpush1.msra.mxu0 0.0
    %86 = vmatprep.subr.mxu0 0.0
    %87 = vmatpush1.msra.mxu0 0.0
    %88 = vmatprep.subr.mxu0 0.0
    %89 = vmatpush1.msra.mxu0 0.0
    %90 = vmatprep.subr.mxu0 0.0
    %91 = vmatpush1.msra.mxu0 0.0
    %92 = vmatprep.subr.mxu0 0.0
    %93 = vmatpush1.msra.mxu0 0.0
    %94 = vmatprep.subr.mxu0 0.0
    %95 = vmatpush1.msra.mxu0 0.0
    %96 = vmatprep.subr.mxu0 0.0
    %97 = vmatpush1.msra.mxu0 0.0
    %98 = vmatprep.subr.mxu0 0.0
    %99 = vmatpush1.msra.mxu0 0.0
    %100 = vmatprep.subr.mxu0 0.0
    %101 = vmatpush1.msra.mxu0 0.0
    %102 = vmatprep.subr.mxu0 0.0
    %103 = vmatpush1.msra.mxu0 0.0
    %104 = vmatprep.subr.mxu0 0.0
    %105 = vmatpush1.msra.mxu0 0.0
    %106 = vmatprep.mubr.f32.mxu0 0.0
    %107 = vmatmul.mubr.f32.gmra.mrb[0].mxu0 %v37
    %v108 = vpop.f32.mrb[0].mxu0
    %v109 = vadd.f32 0.0, %v108
    %v110 = vpop.f32.mrb[0].mxu0
    %111 = vmatprep.mubr.f32.mxu0 0.0
    %112 = vmatmul.mubr.f32.gmra.mrb[0].mxu0 %v40
    %v113 = vpop.f32.mrb[0].mxu0
    %v114 = vadd.f32 0.0, %v113
    %v115 = vpop.f32.mrb[0].mxu0
    %116 = vdwg.mxu0
    %v117 = vld [vmem:[%s2] sm:$0xff]
    %v118 = vlaneseq
    %v119 = vshrl.u32 %v118, 7
    %v120 = vsub.s32 0, %v119
    %v121 = vrot.slane %v34, %v120
    %vm122 = vcmask 64512
    %v124 = vsel %vm122, %v109, 0
    %v127 = vsel %vm122, %v114, 0
    %129 = vmatprep.subr.mxu0 0.0
    %130 = vmatpush1.msra.mxu0 %v117
    %131 = vmatprep.subr.mxu0 0.0
    %132 = vmatpush1.msra.mxu0 0.0
    %133 = vmatprep.subr.mxu0 0.0
    %134 = vmatpush1.msra.mxu0 0.0
    %135 = vmatprep.subr.mxu0 0.0
    %136 = vmatpush1.msra.mxu0 0.0
    %137 = vmatprep.subr.mxu0 0.0
    %138 = vmatpush1.msra.mxu0 0.0
    %139 = vmatprep.subr.mxu0 0.0
    %140 = vmatpush1.msra.mxu0 0.0
    %141 = vmatprep.subr.mxu0 0.0
    %142 = vmatpush1.msra.mxu0 0.0
    %143 = vmatprep.subr.mxu0 0.0
    %144 = vmatpush1.msra.mxu0 0.0
    %145 = vmatprep.subr.mxu0 0.0
    %146 = vmatpush1.msra.mxu0 0.0
    %147 = vmatprep.subr.mxu0 0.0
    %148 = vmatpush1.msra.mxu0 0.0
    %149 = vmatprep.subr.mxu0 0.0
    %150 = vmatpush1.msra.mxu0 0.0
    %151 = vmatprep.subr.mxu0 0.0
    %152 = vmatpush1.msra.mxu0 0.0
    %153 = vmatprep.subr.mxu0 0.0
    %154 = vmatpush1.msra.mxu0 0.0
    %155 = vmatprep.subr.mxu0 0.0
    %156 = vmatpush1.msra.mxu0 0.0
    %157 = vmatprep.subr.mxu0 0.0
    %158 = vmatpush1.msra.mxu0 0.0
    %159 = vmatprep.subr.mxu0 0.0
    %160 = vmatpush1.msra.mxu0 0.0
    %161 = vmatprep.subr.mxu0 0.0
    %162 = vmatpush1.msra.mxu0 0.0
    %163 = vmatprep.subr.mxu0 0.0
    %164 = vmatpush1.msra.mxu0 0.0
    %165 = vmatprep.subr.mxu0 0.0
    %166 = vmatpush1.msra.mxu0 0.0
    %167 = vmatprep.subr.mxu0 0.0
    %168 = vmatpush1.msra.mxu0 0.0
    %169 = vmatprep.subr.mxu0 0.0
    %170 = vmatpush1.msra.mxu0 0.0
    %171 = vmatprep.subr.mxu0 0.0
    %172 = vmatpush1.msra.mxu0 0.0
    %173 = vmatprep.subr.mxu0 0.0
    %174 = vmatpush1.msra.mxu0 0.0
    %175 = vmatprep.subr.mxu0 0.0
    %176 = vmatpush1.msra.mxu0 0.0
    %177 = vmatprep.subr.mxu0 0.0
    %178 = vmatpush1.msra.mxu0 0.0
    %179 = vmatprep.subr.mxu0 0.0
    %180 = vmatpush1.msra.mxu0 0.0
    %181 = vmatprep.subr.mxu0 0.0
    %182 = vmatpush1.msra.mxu0 0.0
    %183 = vmatprep.subr.mxu0 0.0
    %184 = vmatpush1.msra.mxu0 0.0
    %185 = vmatprep.subr.mxu0 0.0
    %186 = vmatpush1.msra.mxu0 0.0
    %187 = vmatprep.subr.mxu0 0.0
    %188 = vmatpush1.msra.mxu0 0.0
    %189 = vmatprep.subr.mxu0 0.0
    %190 = vmatpush1.msra.mxu0 0.0
    %191 = vmatprep.subr.mxu0 0.0
    %192 = vmatpush1.msra.mxu0 0.0
    %193 = vmatprep.mubr.f32.mxu0 0.0
    %194 = vmatmul.mubr.f32.gmra.mrb[0].mxu0 %v124
    %v195 = vpop.f32.mrb[0].mxu0
    %v196 = vadd.f32 %v121, %v195
    %v197 = vpop.f32.mrb[0].mxu0
    %198 = vmatprep.mubr.f32.mxu0 0.0
    %199 = vmatmul.mubr.f32.gmra.mrb[0].mxu0 %v127
    %v200 = vpop.f32.mrb[0].mxu0
    %v201 = vadd.f32 %v121, %v200
    %v202 = vpop.f32.mrb[0].mxu0
    %203 = vdwg.mxu0
    %v204 = vld [vmem:[%s2 + $0x8] sm:$0xff]
    %v206 = vsel %vm122, %v30, 0
    %v209 = vsel %vm122, %v31, 0
    %211 = vmatprep.subr.mxu0 0.0
    %212 = vmatpush1.msra.mxu0 %v204
    %213 = vmatprep.subr.mxu0 0.0
    %214 = vmatpush1.msra.mxu0 0.0
    %215 = vmatprep.subr.mxu0 0.0
    %216 = vmatpush1.msra.mxu0 0.0
    %217 = vmatprep.subr.mxu0 0.0
    %218 = vmatpush1.msra.mxu0 0.0
    %219 = vmatprep.subr.mxu0 0.0
    %220 = vmatpush1.msra.mxu0 0.0
    %221 = vmatprep.subr.mxu0 0.0
    %222 = vmatpush1.msra.mxu0 0.0
    %223 = vmatprep.subr.mxu0 0.0
    %224 = vmatpush1.msra.mxu0 0.0
    %225 = vmatprep.subr.mxu0 0.0
    %226 = vmatpush1.msra.mxu0 0.0
    %227 = vmatprep.subr.mxu0 0.0
    %228 = vmatpush1.msra.mxu0 0.0
    %229 = vmatprep.subr.mxu0 0.0
    %230 = vmatpush1.msra.mxu0 0.0
    %231 = vmatprep.subr.mxu0 0.0
    %232 = vmatpush1.msra.mxu0 0.0
    %233 = vmatprep.subr.mxu0 0.0
    %234 = vmatpush1.msra.mxu0 0.0
    %235 = vmatprep.subr.mxu0 0.0
    %236 = vmatpush1.msra.mxu0 0.0
    %237 = vmatprep.subr.mxu0 0.0
    %238 = vmatpush1.msra.mxu0 0.0
    %239 = vmatprep.subr.mxu0 0.0
    %240 = vmatpush1.msra.mxu0 0.0
    %241 = vmatprep.subr.mxu0 0.0
    %242 = vmatpush1.msra.mxu0 0.0
    %243 = vmatprep.subr.mxu0 0.0
    %244 = vmatpush1.msra.mxu0 0.0
    %245 = vmatprep.subr.mxu0 0.0
    %246 = vmatpush1.msra.mxu0 0.0
    %247 = vmatprep.subr.mxu0 0.0
    %248 = vmatpush1.msra.mxu0 0.0
    %249 = vmatprep.subr.mxu0 0.0
    %250 = vmatpush1.msra.mxu0 0.0
    %251 = vmatprep.subr.mxu0 0.0
    %252 = vmatpush1.msra.mxu0 0.0
    %253 = vmatprep.subr.mxu0 0.0
    %254 = vmatpush1.msra.mxu0 0.0
    %255 = vmatprep.subr.mxu0 0.0
    %256 = vmatpush1.msra.mxu0 0.0
    %257 = vmatprep.subr.mxu0 0.0
    %258 = vmatpush1.msra.mxu0 0.0
    %259 = vmatprep.subr.mxu0 0.0
    %260 = vmatpush1.msra.mxu0 0.0
    %261 = vmatprep.subr.mxu0 0.0
    %262 = vmatpush1.msra.mxu0 0.0
    %263 = vmatprep.subr.mxu0 0.0
    %264 = vmatpush1.msra.mxu0 0.0
    %265 = vmatprep.subr.mxu0 0.0
    %266 = vmatpush1.msra.mxu0 0.0
    %267 = vmatprep.subr.mxu0 0.0
    %268 = vmatpush1.msra.mxu0 0.0
    %269 = vmatprep.subr.mxu0 0.0
    %270 = vmatpush1.msra.mxu0 0.0
    %271 = vmatprep.subr.mxu0 0.0
    %272 = vmatpush1.msra.mxu0 0.0
    %273 = vmatprep.subr.mxu0 0.0
    %274 = vmatpush1.msra.mxu0 0.0
    %275 = vmatprep.mubr.f32.mxu0 0.0
    %276 = vmatmul.mubr.f32.gmra.mrb[0].mxu0 %v206
    %v277 = vpop.f32.mrb[0].mxu0
    %v278 = vadd.f32 0.0, %v277
    %v279 = vpop.f32.mrb[0].mxu0
    %280 = vmatprep.mubr.f32.mxu0 0.0
    %281 = vmatmul.mubr.f32.gmra.mrb[0].mxu0 %v209
    %v282 = vpop.f32.mrb[0].mxu0
    %v283 = vadd.f32 0.0, %v282
    %v284 = vpop.f32.mrb[0].mxu0
    %285 = vdwg.mxu0
    %v286 = vadd.f32 %v196, %v278
    %v287 = vadd.f32 %v201, %v283
    %v288 = vld [vmem:[%s6 + $0x1] sm:$0x1]
    %v289 = vld [vmem:[%s6 + $0x2] sm:$0x1]
    %v290 = vmax.f32 %v286, 0.0
    %v291 = vmax.f32 %v287, 0.0
    %vm292 = vcmask 261120
    %v293 = vsel %vm292, %v290, 0.0
    %v294 = vsel %vm292, %v291, 0.0
    %v295 = vadd.f32 %v293, %v294
    %v296 = vrot.slane %v295, 4
    %v297 = vadd.f32 %v295, %v296
    %v298 = vrot.slane %v297, 2
    %v299 = vadd.f32 %v297, %v298
    %v300 = vrot.slane %v299, 1
    %v301 = vadd.f32 %v299, %v300
    %v302 = vrcp.pop 16.0
    %v303 = vmul.f32 %v301, %v302
    %v304 = vsub.f32 %v290, %v303
    %v305 = vsub.f32 %v291, %v303
    %v306 = vmul.f32 %v304, %v304
    %v307 = vmul.f32 %v305, %v305
    %v308 = vsel %vm292, %v306, 0.0
    %v309 = vsel %vm292, %v307, 0.0
    %v310 = vadd.f32 %v308, %v309
    %v311 = vrot.slane %v310, 4
    %v312 = vadd.f32 %v310, %v311
    %v313 = vrot.slane %v312, 2
    %v314 = vadd.f32 %v312, %v313
    %v315 = vrot.slane %v314, 1
    %v316 = vadd.f32 %v314, %v315
    %v317 = vmul.f32 %v316, %v302
    %v318 = vadd.f32 %v317, 1e-05
    %v319 = vrsqrt.pop %v318
    %v320 = vmul.f32 %v288, %v319
    %v321 = vlaneseq
    %v322 = vshrl.u32 %v321, 7
    %v323 = vsub.s32 0, %v322
    %v324 = vrot.slane %v320, %v323
    %v325 = vmul.f32 %v290, %v324
    %v326 = vmul.f32 %v291, %v324
    %v327 = vmul.f32 %v303, %v320
    %v328 = vsub.f32 %v289, %v327
    %v329 = vlaneseq
    %v330 = vshrl.u32 %v329, 7
    %v331 = vsub.s32 0, %v330
    %v332 = vrot.slane %v328, %v331
    %v333 = vadd.f32 %v325, %v332
    %v334 = vadd.f32 %v326, %v332
    %v335 = vld [vmem:[%s6 + $0x3] sm:$0x1]
    %336 = vmatprep.subr.mxu0 0.0
    %337 = vmatpush1.msra.mxu0 %v333
    %338 = vmatprep.subr.mxu0 0.0
    %339 = vmatpush1.msra.mxu0 %v334
    %340 = vmatprep.subr.mxu0 0.0
    %341 = vmatpush1.msra.mxu0 0.0
    %342 = vmatprep.subr.mxu0 0.0
    %343 = vmatpush1.msra.mxu0 0.0
    %344 = vmatprep.subr.mxu0 0.0
    %345 = vmatpush1.msra.mxu0 0.0
    %346 = vmatprep.subr.mxu0 0.0
    %347 = vmatpush1.msra.mxu0 0.0
    %348 = vmatprep.subr.mxu0 0.0
    %349 = vmatpush1.msra.mxu0 0.0
    %350 = vmatprep.subr.mxu0 0.0
    %351 = vmatpush1.msra.mxu0 0.0
    %352 = vmatprep.subr.mxu0 0.0
    %353 = vmatpush1.msra.mxu0 0.0
    %354 = vmatprep.subr.mxu0 0.0
    %355 = vmatpush1.msra.mxu0 0.0
    %356 = vmatprep.subr.mxu0 0.0
    %357 = vmatpush1.msra.mxu0 0.0
    %358 = vmatprep.subr.mxu0 0.0
    %359 = vmatpush1.msra.mxu0 0.0
    %360 = vmatprep.subr.mxu0 0.0
    %361 = vmatpush1.msra.mxu0 0.0
    %362 = vmatprep.subr.mxu0 0.0
    %363 = vmatpush1.msra.mxu0 0.0
    %364 = vmatprep.subr.mxu0 0.0
    %365 = vmatpush1.msra.mxu0 0.0
    %366 = vmatprep.subr.mxu0 0.0
    %367 = vmatpush1.msra.mxu0 0.0
    %368 = vmatprep.subr.mxu0 0.0
    %369 = vmatpush1.msra.mxu0 0.0
    %370 = vmatprep.subr.mxu0 0.0
    %371 = vmatpush1.msra.mxu0 0.0
    %372 = vmatprep.subr.mxu0 0.0
    %373 = vmatpush1.msra.mxu0 0.0
    %374 = vmatprep.subr.mxu0 0.0
    %375 = vmatpush1.msra.mxu0 0.0
    %376 = vmatprep.subr.mxu0 0.0
    %377 = vmatpush1.msra.mxu0 0.0
    %378 = vmatprep.subr.mxu0 0.0
    %379 = vmatpush1.msra.mxu0 0.0
    %380 = vmatprep.subr.mxu0 0.0
    %381 = vmatpush1.msra.mxu0 0.0
    %382 = vmatprep.subr.mxu0 0.0
    %383 = vmatpush1.msra.mxu0 0.0
    %384 = vmatprep.subr.mxu0 0.0
    %385 = vmatpush1.msra.mxu0 0.0
    %386 = vmatprep.subr.mxu0 0.0
    %387 = vmatpush1.msra.mxu0 0.0
    %388 = vmatprep.subr.mxu0 0.0
    %389 = vmatpush1.msra.mxu0 0.0
    %390 = vmatprep.subr.mxu0 0.0
    %391 = vmatpush1.msra.mxu0 0.0
    %392 = vmatprep.subr.mxu0 0.0
    %393 = vmatpush1.msra.mxu0 0.0
    %394 = vmatprep.subr.mxu0 0.0
    %395 = vmatpush1.msra.mxu0 0.0
    %396 = vmatprep.subr.mxu0 0.0
    %397 = vmatpush1.msra.mxu0 0.0
    %398 = vmatprep.subr.mxu0 0.0
    %399 = vmatpush1.msra.mxu0 0.0
    %400 = vmatprep.mubr.f32.mxu0 0.0
    %401 = vmatmul.mubr.f32.gmra.mrb[0].mxu0 %v37
    %v402 = vpop.f32.mrb[0].mxu0
    %v403 = vadd.f32 0.0, %v402
    %v404 = vpop.f32.mrb[0].mxu0
    %405 = vmatprep.mubr.f32.mxu0 0.0
    %406 = vmatmul.mubr.f32.gmra.mrb[0].mxu0 %v40
    %v407 = vpop.f32.mrb[0].mxu0
    %v408 = vadd.f32 0.0, %v407
    %v409 = vpop.f32.mrb[0].mxu0
    %410 = vdwg.mxu0
    %v411 = vld [vmem:[%s3] sm:$0xff]
    %v412 = vld [vmem:[%s3 + $0x8] sm:$0xff]
    %v413 = vld [vmem:[%s3 + $0x10] sm:$0xff]
    %v414 = vld [vmem:[%s3 + $0x18] sm:$0xff]
    %v415 = vlaneseq
    %v416 = vshrl.u32 %v415, 7
    %v417 = vsub.s32 0, %v416
    %v418 = vrot.slane %v335, %v417
    %v420 = vsel %vm292, %v403, 0
    %v423 = vsel %vm292, %v408, 0
    %425 = vmatprep.subr.mxu0 0.0
    %426 = vmatpush1.msra.mxu0 %v411
    %427 = vmatprep.subr.mxu0 0.0
    %428 = vmatpush1.msra.mxu0 %v412
    %429 = vmatprep.subr.mxu0 0.0
    %430 = vmatpush1.msra.mxu0 %v413
    %431 = vmatprep.subr.mxu0 0.0
    %432 = vmatpush1.msra.mxu0 %v414
    %433 = vmatprep.subr.mxu0 0.0
    %434 = vmatpush1.msra.mxu0 0.0
    %435 = vmatprep.subr.mxu0 0.0
    %436 = vmatpush1.msra.mxu0 0.0
    %437 = vmatprep.subr.mxu0 0.0
    %438 = vmatpush1.msra.mxu0 0.0
    %439 = vmatprep.subr.mxu0 0.0
    %440 = vmatpush1.msra.mxu0 0.0
    %441 = vmatprep.subr.mxu0 0.0
    %442 = vmatpush1.msra.mxu0 0.0
    %443 = vmatprep.subr.mxu0 0.0
    %444 = vmatpush1.msra.mxu0 0.0
    %445 = vmatprep.subr.mxu0 0.0
    %446 = vmatpush1.msra.mxu0 0.0
    %447 = vmatprep.subr.mxu0 0.0
    %448 = vmatpush1.msra.mxu0 0.0
    %449 = vmatprep.subr.mxu0 0.0
    %450 = vmatpush1.msra.mxu0 0.0
    %451 = vmatprep.subr.mxu0 0.0
    %452 = vmatpush1.msra.mxu0 0.0
    %453 = vmatprep.subr.mxu0 0.0
    %454 = vmatpush1.msra.mxu0 0.0
    %455 = vmatprep.subr.mxu0 0.0
    %456 = vmatpush1.msra.mxu0 0.0
    %457 = vmatprep.subr.mxu0 0.0
    %458 = vmatpush1.msra.mxu0 0.0
    %459 = vmatprep.subr.mxu0 0.0
    %460 = vmatpush1.msra.mxu0 0.0
    %461 = vmatprep.subr.mxu0 0.0
    %462 = vmatpush1.msra.mxu0 0.0
    %463 = vmatprep.subr.mxu0 0.0
    %464 = vmatpush1.msra.mxu0 0.0
    %465 = vmatprep.subr.mxu0 0.0
    %466 = vmatpush1.msra.mxu0 0.0
    %467 = vmatprep.subr.mxu0 0.0
    %468 = vmatpush1.msra.mxu0 0.0
    %469 = vmatprep.subr.mxu0 0.0
    %470 = vmatpush1.msra.mxu0 0.0
    %471 = vmatprep.subr.mxu0 0.0
    %472 = vmatpush1.msra.mxu0 0.0
    %473 = vmatprep.subr.mxu0 0.0
    %474 = vmatpush1.msra.mxu0 0.0
    %475 = vmatprep.subr.mxu0 0.0
    %476 = vmatpush1.msra.mxu0 0.0
    %477 = vmatprep.subr.mxu0 0.0
    %478 = vmatpush1.msra.mxu0 0.0
    %479 = vmatprep.subr.mxu0 0.0
    %480 = vmatpush1.msra.mxu0 0.0
    %481 = vmatprep.subr.mxu0 0.0
    %482 = vmatpush1.msra.mxu0 0.0
    %483 = vmatprep.subr.mxu0 0.0
    %484 = vmatpush1.msra.mxu0 0.0
    %485 = vmatprep.subr.mxu0 0.0
    %486 = vmatpush1.msra.mxu0 0.0
    %487 = vmatprep.subr.mxu0 0.0
    %488 = vmatpush1.msra.mxu0 0.0
    %489 = vmatprep.mubr.f32.mxu0 0.0
    %490 = vmatmul.mubr.f32.gmra.mrb[0].mxu0 %v420
    %v491 = vpop.f32.mrb[0].mxu0
    %v492 = vadd.f32 %v418, %v491
    %v493 = vpop.f32.mrb[0].mxu0
    %494 = vmatprep.mubr.f32.mxu0 0.0
    %495 = vmatmul.mubr.f32.gmra.mrb[0].mxu0 %v423
    %v496 = vpop.f32.mrb[0].mxu0
    %v497 = vadd.f32 %v418, %v496
    %v498 = vpop.f32.mrb[0].mxu0
    %499 = vdwg.mxu0
    %v500 = vld [vmem:[%s3 + $0x20] sm:$0xff]
    %v501 = vld [vmem:[%s3 + $0x28] sm:$0xff]
    %v502 = vld [vmem:[%s3 + $0x30] sm:$0xff]
    %v503 = vld [vmem:[%s3 + $0x38] sm:$0xff]
    %v505 = vsel %vm292, %v333, 0
    %v508 = vsel %vm292, %v334, 0
    %510 = vmatprep.subr.mxu0 0.0
    %511 = vmatpush1.msra.mxu0 %v500
    %512 = vmatprep.subr.mxu0 0.0
    %513 = vmatpush1.msra.mxu0 %v501
    %514 = vmatprep.subr.mxu0 0.0
    %515 = vmatpush1.msra.mxu0 %v502
    %516 = vmatprep.subr.mxu0 0.0
    %517 = vmatpush1.msra.mxu0 %v503
    %518 = vmatprep.subr.mxu0 0.0
    %519 = vmatpush1.msra.mxu0 0.0
    %520 = vmatprep.subr.mxu0 0.0
    %521 = vmatpush1.msra.mxu0 0.0
    %522 = vmatprep.subr.mxu0 0.0
    %523 = vmatpush1.msra.mxu0 0.0
    %524 = vmatprep.subr.mxu0 0.0
    %525 = vmatpush1.msra.mxu0 0.0
    %526 = vmatprep.subr.mxu0 0.0
    %527 = vmatpush1.msra.mxu0 0.0
    %528 = vmatprep.subr.mxu0 0.0
    %529 = vmatpush1.msra.mxu0 0.0
    %530 = vmatprep.subr.mxu0 0.0
    %531 = vmatpush1.msra.mxu0 0.0
    %532 = vmatprep.subr.mxu0 0.0
    %533 = vmatpush1.msra.mxu0 0.0
    %534 = vmatprep.subr.mxu0 0.0
    %535 = vmatpush1.msra.mxu0 0.0
    %536 = vmatprep.subr.mxu0 0.0
    %537 = vmatpush1.msra.mxu0 0.0
    %538 = vmatprep.subr.mxu0 0.0
    %539 = vmatpush1.msra.mxu0 0.0
    %540 = vmatprep.subr.mxu0 0.0
    %541 = vmatpush1.msra.mxu0 0.0
    %542 = vmatprep.subr.mxu0 0.0
    %543 = vmatpush1.msra.mxu0 0.0
    %544 = vmatprep.subr.mxu0 0.0
    %545 = vmatpush1.msra.mxu0 0.0
    %546 = vmatprep.subr.mxu0 0.0
    %547 = vmatpush1.msra.mxu0 0.0
    %548 = vmatprep.subr.mxu0 0.0
    %549 = vmatpush1.msra.mxu0 0.0
    %550 = vmatprep.subr.mxu0 0.0
    %551 = vmatpush1.msra.mxu0 0.0
    %552 = vmatprep.subr.mxu0 0.0
    %553 = vmatpush1.msra.mxu0 0.0
    %554 = vmatprep.subr.mxu0 0.0
    %555 = vmatpush1.msra.mxu0 0.0
    %556 = vmatprep.subr.mxu0 0.0
    %557 = vmatpush1.msra.mxu0 0.0
    %558 = vmatprep.subr.mxu0 0.0
    %559 = vmatpush1.msra.mxu0 0.0
    %560 = vmatprep.subr.mxu0 0.0
    %561 = vmatpush1.msra.mxu0 0.0
    %562 = vmatprep.subr.mxu0 0.0
    %563 = vmatpush1.msra.mxu0 0.0
    %564 = vmatprep.subr.mxu0 0.0
    %565 = vmatpush1.msra.mxu0 0.0
    %566 = vmatprep.subr.mxu0 0.0
    %567 = vmatpush1.msra.mxu0 0.0
    %568 = vmatprep.subr.mxu0 0.0
    %569 = vmatpush1.msra.mxu0 0.0
    %570 = vmatprep.subr.mxu0 0.0
    %571 = vmatpush1.msra.mxu0 0.0
    %572 = vmatprep.subr.mxu0 0.0
    %573 = vmatpush1.msra.mxu0 0.0
    %574 = vmatprep.mubr.f32.mxu0 0.0
    %575 = vmatmul.mubr.f32.gmra.mrb[0].mxu0 %v505
    %v576 = vpop.f32.mrb[0].mxu0
    %v577 = vadd.f32 0.0, %v576
    %v578 = vpop.f32.mrb[0].mxu0
    %579 = vmatprep.mubr.f32.mxu0 0.0
    %580 = vmatmul.mubr.f32.gmra.mrb[0].mxu0 %v508
    %v581 = vpop.f32.mrb[0].mxu0
    %v582 = vadd.f32 0.0, %v581
    %v583 = vpop.f32.mrb[0].mxu0
    %584 = vdwg.mxu0
    %v585 = vadd.f32 %v492, %v577
    %v586 = vadd.f32 %v497, %v582
    %v587 = vld [vmem:[%s6 + $0x4] sm:$0x1]
    %v588 = vld [vmem:[%s6 + $0x5] sm:$0x1]
    %v589 = vmax.f32 %v585, 0.0
    %v590 = vmax.f32 %v586, 0.0
    %v591 = vsel %vm292, %v589, 0.0
    %v592 = vsel %vm292, %v590, 0.0
    %v593 = vadd.f32 %v591, %v592
    %v594 = vrot.slane %v593, 4
    %v595 = vadd.f32 %v593, %v594
    %v596 = vrot.slane %v595, 2
    %v597 = vadd.f32 %v595, %v596
    %v598 = vrot.slane %v597, 1
    %v599 = vadd.f32 %v597, %v598
    %v600 = vmul.f32 %v599, %v302
    %v601 = vsub.f32 %v589, %v600
    %v602 = vsub.f32 %v590, %v600
    %v603 = vmul.f32 %v601, %v601
    %v604 = vmul.f32 %v602, %v602
    %v605 = vsel %vm292, %v603, 0.0
    %v606 = vsel %vm292, %v604, 0.0
    %v607 = vadd.f32 %v605, %v606
    %v608 = vrot.slane %v607, 4
    %v609 = vadd.f32 %v607, %v608
    %v610 = vrot.slane %v609, 2
    %v611 = vadd.f32 %v609, %v610
    %v612 = vrot.slane %v611, 1
    %v613 = vadd.f32 %v611, %v612
    %v614 = vmul.f32 %v613, %v302
    %v615 = vadd.f32 %v614, 1e-05
    %v616 = vrsqrt.pop %v615
    %v617 = vmul.f32 %v587, %v616
    %v618 = vlaneseq
    %v619 = vshrl.u32 %v618, 7
    %v620 = vsub.s32 0, %v619
    %v621 = vrot.slane %v617, %v620
    %v622 = vmul.f32 %v589, %v621
    %v623 = vmul.f32 %v590, %v621
    %v624 = vmul.f32 %v600, %v617
    %v625 = vsub.f32 %v588, %v624
    %v626 = vlaneseq
    %v627 = vshrl.u32 %v626, 7
    %v628 = vsub.s32 0, %v627
    %v629 = vrot.slane %v625, %v628
    %v630 = vadd.f32 %v622, %v629
    %v631 = vadd.f32 %v623, %v629
    %v632 = vld [vmem:[%s6 + $0x6] sm:$0x1]
    %633 = vmatprep.subr.mxu0 0.0
    %634 = vmatpush1.msra.mxu0 %v630
    %635 = vmatprep.subr.mxu0 0.0
    %636 = vmatpush1.msra.mxu0 %v631
    %637 = vmatprep.subr.mxu0 0.0
    %638 = vmatpush1.msra.mxu0 0.0
    %639 = vmatprep.subr.mxu0 0.0
    %640 = vmatpush1.msra.mxu0 0.0
    %641 = vmatprep.subr.mxu0 0.0
    %642 = vmatpush1.msra.mxu0 0.0
    %643 = vmatprep.subr.mxu0 0.0
    %644 = vmatpush1.msra.mxu0 0.0
    %645 = vmatprep.subr.mxu0 0.0
    %646 = vmatpush1.msra.mxu0 0.0
    %647 = vmatprep.subr.mxu0 0.0
    %648 = vmatpush1.msra.mxu0 0.0
    %649 = vmatprep.subr.mxu0 0.0
    %650 = vmatpush1.msra.mxu0 0.0
    %651 = vmatprep.subr.mxu0 0.0
    %652 = vmatpush1.msra.mxu0 0.0
    %653 = vmatprep.subr.mxu0 0.0
    %654 = vmatpush1.msra.mxu0 0.0
    %655 = vmatprep.subr.mxu0 0.0
    %656 = vmatpush1.msra.mxu0 0.0
    %657 = vmatprep.subr.mxu0 0.0
    %658 = vmatpush1.msra.mxu0 0.0
    %659 = vmatprep.subr.mxu0 0.0
    %660 = vmatpush1.msra.mxu0 0.0
    %661 = vmatprep.subr.mxu0 0.0
    %662 = vmatpush1.msra.mxu0 0.0
    %663 = vmatprep.subr.mxu0 0.0
    %664 = vmatpush1.msra.mxu0 0.0
    %665 = vmatprep.subr.mxu0 0.0
    %666 = vmatpush1.msra.mxu0 0.0
    %667 = vmatprep.subr.mxu0 0.0
    %668 = vmatpush1.msra.mxu0 0.0
    %669 = vmatprep.subr.mxu0 0.0
    %670 = vmatpush1.msra.mxu0 0.0
    %671 = vmatprep.subr.mxu0 0.0
    %672 = vmatpush1.msra.mxu0 0.0
    %673 = vmatprep.subr.mxu0 0.0
    %674 = vmatpush1.msra.mxu0 0.0
    %675 = vmatprep.subr.mxu0 0.0
    %676 = vmatpush1.msra.mxu0 0.0
    %677 = vmatprep.subr.mxu0 0.0
    %678 = vmatpush1.msra.mxu0 0.0
    %679 = vmatprep.subr.mxu0 0.0
    %680 = vmatpush1.msra.mxu0 0.0
    %681 = vmatprep.subr.mxu0 0.0
    %682 = vmatpush1.msra.mxu0 0.0
    %683 = vmatprep.subr.mxu0 0.0
    %684 = vmatpush1.msra.mxu0 0.0
    %685 = vmatprep.subr.mxu0 0.0
    %686 = vmatpush1.msra.mxu0 0.0
    %687 = vmatprep.subr.mxu0 0.0
    %688 = vmatpush1.msra.mxu0 0.0
    %689 = vmatprep.subr.mxu0 0.0
    %690 = vmatpush1.msra.mxu0 0.0
    %691 = vmatprep.subr.mxu0 0.0
    %692 = vmatpush1.msra.mxu0 0.0
    %693 = vmatprep.subr.mxu0 0.0
    %694 = vmatpush1.msra.mxu0 0.0
    %695 = vmatprep.subr.mxu0 0.0
    %696 = vmatpush1.msra.mxu0 0.0
    %697 = vmatprep.mubr.f32.mxu0 0.0
    %698 = vmatmul.mubr.f32.gmra.mrb[0].mxu0 %v37
    %v699 = vpop.f32.mrb[0].mxu0
    %v700 = vadd.f32 0.0, %v699
    %v701 = vpop.f32.mrb[0].mxu0
    %702 = vmatprep.mubr.f32.mxu0 0.0
    %703 = vmatmul.mubr.f32.gmra.mrb[0].mxu0 %v40
    %v704 = vpop.f32.mrb[0].mxu0
    %v705 = vadd.f32 0.0, %v704
    %v706 = vpop.f32.mrb[0].mxu0
    %707 = vdwg.mxu0
    %v708 = vld [vmem:[%s4] sm:$0xff]
    %v709 = vld [vmem:[%s4 + $0x8] sm:$0xff]
    %v710 = vld [vmem:[%s4 + $0x10] sm:$0xff]
    %v711 = vld [vmem:[%s4 + $0x18] sm:$0xff]
    %v712 = vlaneseq
    %v713 = vshrl.u32 %v712, 7
    %v714 = vsub.s32 0, %v713
    %v715 = vrot.slane %v632, %v714
    %v717 = vsel %vm292, %v700, 0
    %v720 = vsel %vm292, %v705, 0
    %722 = vmatprep.subr.mxu0 0.0
    %723 = vmatpush1.msra.mxu0 %v708
    %724 = vmatprep.subr.mxu0 0.0
    %725 = vmatpush1.msra.mxu0 %v709
    %726 = vmatprep.subr.mxu0 0.0
    %727 = vmatpush1.msra.mxu0 %v710
    %728 = vmatprep.subr.mxu0 0.0
    %729 = vmatpush1.msra.mxu0 %v711
    %730 = vmatprep.subr.mxu0 0.0
    %731 = vmatpush1.msra.mxu0 0.0
    %732 = vmatprep.subr.mxu0 0.0
    %733 = vmatpush1.msra.mxu0 0.0
    %734 = vmatprep.subr.mxu0 0.0
    %735 = vmatpush1.msra.mxu0 0.0
    %736 = vmatprep.subr.mxu0 0.0
    %737 = vmatpush1.msra.mxu0 0.0
    %738 = vmatprep.subr.mxu0 0.0
    %739 = vmatpush1.msra.mxu0 0.0
    %740 = vmatprep.subr.mxu0 0.0
    %741 = vmatpush1.msra.mxu0 0.0
    %742 = vmatprep.subr.mxu0 0.0
    %743 = vmatpush1.msra.mxu0 0.0
    %744 = vmatprep.subr.mxu0 0.0
    %745 = vmatpush1.msra.mxu0 0.0
    %746 = vmatprep.subr.mxu0 0.0
    %747 = vmatpush1.msra.mxu0 0.0
    %748 = vmatprep.subr.mxu0 0.0
    %749 = vmatpush1.msra.mxu0 0.0
    %750 = vmatprep.subr.mxu0 0.0
    %751 = vmatpush1.msra.mxu0 0.0
    %752 = vmatprep.subr.mxu0 0.0
    %753 = vmatpush1.msra.mxu0 0.0
    %754 = vmatprep.subr.mxu0 0.0
    %755 = vmatpush1.msra.mxu0 0.0
    %756 = vmatprep.subr.mxu0 0.0
    %757 = vmatpush1.msra.mxu0 0.0
    %758 = vmatprep.subr.mxu0 0.0
    %759 = vmatpush1.msra.mxu0 0.0
    %760 = vmatprep.subr.mxu0 0.0
    %761 = vmatpush1.msra.mxu0 0.0
    %762 = vmatprep.subr.mxu0 0.0
    %763 = vmatpush1.msra.mxu0 0.0
    %764 = vmatprep.subr.mxu0 0.0
    %765 = vmatpush1.msra.mxu0 0.0
    %766 = vmatprep.subr.mxu0 0.0
    %767 = vmatpush1.msra.mxu0 0.0
    %768 = vmatprep.subr.mxu0 0.0
    %769 = vmatpush1.msra.mxu0 0.0
    %770 = vmatprep.subr.mxu0 0.0
    %771 = vmatpush1.msra.mxu0 0.0
    %772 = vmatprep.subr.mxu0 0.0
    %773 = vmatpush1.msra.mxu0 0.0
    %774 = vmatprep.subr.mxu0 0.0
    %775 = vmatpush1.msra.mxu0 0.0
    %776 = vmatprep.subr.mxu0 0.0
    %777 = vmatpush1.msra.mxu0 0.0
    %778 = vmatprep.subr.mxu0 0.0
    %779 = vmatpush1.msra.mxu0 0.0
    %780 = vmatprep.subr.mxu0 0.0
    %781 = vmatpush1.msra.mxu0 0.0
    %782 = vmatprep.subr.mxu0 0.0
    %783 = vmatpush1.msra.mxu0 0.0
    %784 = vmatprep.subr.mxu0 0.0
    %785 = vmatpush1.msra.mxu0 0.0
    %786 = vmatprep.mubr.f32.mxu0 0.0
    %787 = vmatmul.mubr.f32.gmra.mrb[0].mxu0 %v717
    %v788 = vpop.f32.mrb[0].mxu0
    %v789 = vadd.f32 %v715, %v788
    %v790 = vpop.f32.mrb[0].mxu0
    %791 = vmatprep.mubr.f32.mxu0 0.0
    %792 = vmatmul.mubr.f32.gmra.mrb[0].mxu0 %v720
    %v793 = vpop.f32.mrb[0].mxu0
    %v794 = vadd.f32 %v715, %v793
    %v795 = vpop.f32.mrb[0].mxu0
    %796 = vdwg.mxu0
    %v797 = vld [vmem:[%s4 + $0x20] sm:$0xff]
    %v798 = vld [vmem:[%s4 + $0x28] sm:$0xff]
    %v799 = vld [vmem:[%s4 + $0x30] sm:$0xff]
    %v800 = vld [vmem:[%s4 + $0x38] sm:$0xff]
    %v802 = vsel %vm292, %v630, 0
    %v805 = vsel %vm292, %v631, 0
    %807 = vmatprep.subr.mxu0 0.0
    %808 = vmatpush1.msra.mxu0 %v797
    %809 = vmatprep.subr.mxu0 0.0
    %810 = vmatpush1.msra.mxu0 %v798
    %811 = vmatprep.subr.mxu0 0.0
    %812 = vmatpush1.msra.mxu0 %v799
    %813 = vmatprep.subr.mxu0 0.0
    %814 = vmatpush1.msra.mxu0 %v800
    %815 = vmatprep.subr.mxu0 0.0
    %816 = vmatpush1.msra.mxu0 0.0
    %817 = vmatprep.subr.mxu0 0.0
    %818 = vmatpush1.msra.mxu0 0.0
    %819 = vmatprep.subr.mxu0 0.0
    %820 = vmatpush1.msra.mxu0 0.0
    %821 = vmatprep.subr.mxu0 0.0
    %822 = vmatpush1.msra.mxu0 0.0
    %823 = vmatprep.subr.mxu0 0.0
    %824 = vmatpush1.msra.mxu0 0.0
    %825 = vmatprep.subr.mxu0 0.0
    %826 = vmatpush1.msra.mxu0 0.0
    %827 = vmatprep.subr.mxu0 0.0
    %828 = vmatpush1.msra.mxu0 0.0
    %829 = vmatprep.subr.mxu0 0.0
    %830 = vmatpush1.msra.mxu0 0.0
    %831 = vmatprep.subr.mxu0 0.0
    %832 = vmatpush1.msra.mxu0 0.0
    %833 = vmatprep.subr.mxu0 0.0
    %834 = vmatpush1.msra.mxu0 0.0
    %835 = vmatprep.subr.mxu0 0.0
    %836 = vmatpush1.msra.mxu0 0.0
    %837 = vmatprep.subr.mxu0 0.0
    %838 = vmatpush1.msra.mxu0 0.0
    %839 = vmatprep.subr.mxu0 0.0
    %840 = vmatpush1.msra.mxu0 0.0
    %841 = vmatprep.subr.mxu0 0.0
    %842 = vmatpush1.msra.mxu0 0.0
    %843 = vmatprep.subr.mxu0 0.0
    %844 = vmatpush1.msra.mxu0 0.0
    %845 = vmatprep.subr.mxu0 0.0
    %846 = vmatpush1.msra.mxu0 0.0
    %847 = vmatprep.subr.mxu0 0.0
    %848 = vmatpush1.msra.mxu0 0.0
    %849 = vmatprep.subr.mxu0 0.0
    %850 = vmatpush1.msra.mxu0 0.0
    %851 = vmatprep.subr.mxu0 0.0
    %852 = vmatpush1.msra.mxu0 0.0
    %853 = vmatprep.subr.mxu0 0.0
    %854 = vmatpush1.msra.mxu0 0.0
    %855 = vmatprep.subr.mxu0 0.0
    %856 = vmatpush1.msra.mxu0 0.0
    %857 = vmatprep.subr.mxu0 0.0
    %858 = vmatpush1.msra.mxu0 0.0
    %859 = vmatprep.subr.mxu0 0.0
    %860 = vmatpush1.msra.mxu0 0.0
    %861 = vmatprep.subr.mxu0 0.0
    %862 = vmatpush1.msra.mxu0 0.0
    %863 = vmatprep.subr.mxu0 0.0
    %864 = vmatpush1.msra.mxu0 0.0
    %865 = vmatprep.subr.mxu0 0.0
    %866 = vmatpush1.msra.mxu0 0.0
    %867 = vmatprep.subr.mxu0 0.0
    %868 = vmatpush1.msra.mxu0 0.0
    %869 = vmatprep.subr.mxu0 0.0
    %870 = vmatpush1.msra.mxu0 0.0
    %871 = vmatprep.mubr.f32.mxu0 0.0
    %872 = vmatmul.mubr.f32.gmra.mrb[0].mxu0 %v802
    %v873 = vpop.f32.mrb[0].mxu0
    %v874 = vadd.f32 0.0, %v873
    %v875 = vpop.f32.mrb[0].mxu0
    %876 = vmatprep.mubr.f32.mxu0 0.0
    %877 = vmatmul.mubr.f32.gmra.mrb[0].mxu0 %v805
    %v878 = vpop.f32.mrb[0].mxu0
    %v879 = vadd.f32 0.0, %v878
    %v880 = vpop.f32.mrb[0].mxu0
    %881 = vdwg.mxu0
    %v882 = vadd.f32 %v789, %v874
    %v883 = vadd.f32 %v794, %v879
    %v884 = vld [vmem:[%s6 + $0x7] sm:$0x1]
    %v885 = vld [vmem:[%s6 + $0x8] sm:$0x1]
    %v886 = vmax.f32 %v882, 0.0
    %v887 = vmax.f32 %v883, 0.0
    %vm888 = vcmask 15360
    %v889 = vsel %vm888, %v886, 0.0
    %v890 = vsel %vm888, %v887, 0.0
    %v891 = vadd.f32 %v889, %v890
    %v892 = vrot.slane %v891, 4
    %v893 = vadd.f32 %v891, %v892
    %v894 = vrot.slane %v893, 2
    %v895 = vadd.f32 %v893, %v894
    %v896 = vrot.slane %v895, 1
    %v897 = vadd.f32 %v895, %v896
    %v898 = vmul.f32 %v897, %v302
    %v899 = vsub.f32 %v886, %v898
    %v900 = vsub.f32 %v887, %v898
    %v901 = vmul.f32 %v899, %v899
    %v902 = vmul.f32 %v900, %v900
    %v903 = vsel %vm888, %v901, 0.0
    %v904 = vsel %vm888, %v902, 0.0
    %v905 = vadd.f32 %v903, %v904
    %v906 = vrot.slane %v905, 4
    %v907 = vadd.f32 %v905, %v906
    %v908 = vrot.slane %v907, 2
    %v909 = vadd.f32 %v907, %v908
    %v910 = vrot.slane %v909, 1
    %v911 = vadd.f32 %v909, %v910
    %v912 = vmul.f32 %v911, %v302
    %v913 = vadd.f32 %v912, 1e-05
    %v914 = vrsqrt.pop %v913
    %v915 = vmul.f32 %v884, %v914
    %v916 = vlaneseq
    %v917 = vshrl.u32 %v916, 7
    %v918 = vsub.s32 0, %v917
    %v919 = vrot.slane %v915, %v918
    %v920 = vmul.f32 %v886, %v919
    %v921 = vmul.f32 %v887, %v919
    %v922 = vmul.f32 %v898, %v915
    %v923 = vsub.f32 %v885, %v922
    %v924 = vlaneseq
    %v925 = vshrl.u32 %v924, 7
    %v926 = vsub.s32 0, %v925
    %v927 = vrot.slane %v923, %v926
    %v928 = vadd.f32 %v920, %v927
    %v929 = vadd.f32 %v921, %v927
    %v930 = vld [vmem:[%s6 + $0x9] sm:$0x1]
    %931 = vst [vmem:[#allocation2] sm:$0xff] 0.0
    %932 = vst [vmem:[#allocation2 + $0x8] sm:$0xff] 0.0
    %933 = vst.msk [vmem:[#allocation2] sm:$0xff] %vm292, %v333
    %934 = vst.msk [vmem:[#allocation2 + $0x8] sm:$0xff] %vm292, %v334
    %935 = vrot.lane.b32.xlu0 %v630, 32
    %v936 = vpop.permute.xlu0 %935
    %937 = vrot.lane.b32.xlu0 %v631, 32
    %v938 = vpop.permute.xlu0 %937
    %vm941 = vcmask 523520
    %942 = vst.msk [vmem:[#allocation2] sm:$0xff] %vm941, %v936
    %943 = vst.msk [vmem:[#allocation2 + $0x8] sm:$0xff] %vm941, %v938
    %946 = vrot.lane.b32.xlu0 %v928, 64
    %v947 = vpop.permute.xlu0 %946
    %948 = vrot.lane.b32.xlu0 %v929, 64
    %v949 = vpop.permute.xlu0 %948
    %vm952 = vcmask 540160
    %953 = vst.msk [vmem:[#allocation2] sm:$0xff] %vm952, %v947
    %954 = vst.msk [vmem:[#allocation2 + $0x8] sm:$0xff] %vm952, %v949
    %v955 = vld [vmem:[#allocation2] sm:$0xff]
    %v956 = vld [vmem:[#allocation2 + $0x8] sm:$0xff]
    %v957 = vld [vmem:[%s5] sm:$0xff]
    %v958 = vld [vmem:[%s5 + $0x8] sm:$0xff]
    %v959 = vld [vmem:[%s5 + $0x10] sm:$0xff]
    %v960 = vld [vmem:[%s5 + $0x18] sm:$0xff]
    %v961 = vld [vmem:[%s5 + $0x20] sm:$0xff]
    %v962 = vld [vmem:[%s5 + $0x28] sm:$0xff]
    %v963 = vld [vmem:[%s5 + $0x30] sm:$0xff]
    %v964 = vld [vmem:[%s5 + $0x38] sm:$0xff]
    %v965 = vld [vmem:[%s5 + $0x40] sm:$0x3]
    %v966 = vlaneseq
    %v967 = vshrl.u32 %v966, 7
    %v968 = vsub.s32 0, %v967
    %v969 = vrot.slane %v930, %v968
    %vm970 = vcmask 539648
    %v972 = vsel %vm970, %v955, 0
    %v975 = vsel %vm970, %v956, 0
    %vm977 = vcmask 1041408
    %v979 = vsel %vm977, %v965, 0
    %981 = vmatprep.subr.mxu0 0.0
    %982 = vmatpush1.msra.mxu0 %v957
    %983 = vmatprep.subr.mxu0 0.0
    %984 = vmatpush1.msra.mxu0 %v958
    %985 = vmatprep.subr.mxu0 0.0
    %986 = vmatpush1.msra.mxu0 %v959
    %987 = vmatprep.subr.mxu0 0.0
    %988 = vmatpush1.msra.mxu0 %v960
    %989 = vmatprep.subr.mxu0 0.0
    %990 = vmatpush1.msra.mxu0 %v961
    %991 = vmatprep.subr.mxu0 0.0
    %992 = vmatpush1.msra.mxu0 %v962
    %993 = vmatprep.subr.mxu0 0.0
    %994 = vmatpush1.msra.mxu0 %v963
    %995 = vmatprep.subr.mxu0 0.0
    %996 = vmatpush1.msra.mxu0 %v964
    %997 = vmatprep.subr.mxu0 0.0
    %998 = vmatpush1.msra.mxu0 %v979
    %999 = vmatprep.subr.mxu0 0.0
    %1000 = vmatpush1.msra.mxu0 0.0
    %1001 = vmatprep.subr.mxu0 0.0
    %1002 = vmatpush1.msra.mxu0 0.0
    %1003 = vmatprep.subr.mxu0 0.0
    %1004 = vmatpush1.msra.mxu0 0.0
    %1005 = vmatprep.subr.mxu0 0.0
    %1006 = vmatpush1.msra.mxu0 0.0
    %1007 = vmatprep.subr.mxu0 0.0
    %1008 = vmatpush1.msra.mxu0 0.0
    %1009 = vmatprep.subr.mxu0 0.0
    %1010 = vmatpush1.msra.mxu0 0.0
    %1011 = vmatprep.subr.mxu0 0.0
    %1012 = vmatpush1.msra.mxu0 0.0
    %1013 = vmatprep.subr.mxu0 0.0
    %1014 = vmatpush1.msra.mxu0 0.0
    %1015 = vmatprep.subr.mxu0 0.0
    %1016 = vmatpush1.msra.mxu0 0.0
    %1017 = vmatprep.subr.mxu0 0.0
    %1018 = vmatpush1.msra.mxu0 0.0
    %1019 = vmatprep.subr.mxu0 0.0
    %1020 = vmatpush1.msra.mxu0 0.0
    %1021 = vmatprep.subr.mxu0 0.0
    %1022 = vmatpush1.msra.mxu0 0.0
    %1023 = vmatprep.subr.mxu0 0.0
    %1024 = vmatpush1.msra.mxu0 0.0
    %1025 = vmatprep.subr.mxu0 0.0
    %1026 = vmatpush1.msra.mxu0 0.0
    %1027 = vmatprep.subr.mxu0 0.0
    %1028 = vmatpush1.msra.mxu0 0.0
    %1029 = vmatprep.subr.mxu0 0.0
    %1030 = vmatpush1.msra.mxu0 0.0
    %1031 = vmatprep.subr.mxu0 0.0
    %1032 = vmatpush1.msra.mxu0 0.0
    %1033 = vmatprep.subr.mxu0 0.0
    %1034 = vmatpush1.msra.mxu0 0.0
    %1035 = vmatprep.subr.mxu0 0.0
    %1036 = vmatpush1.msra.mxu0 0.0
    %1037 = vmatprep.subr.mxu0 0.0
    %1038 = vmatpush1.msra.mxu0 0.0
    %1039 = vmatprep.subr.mxu0 0.0
    %1040 = vmatpush1.msra.mxu0 0.0
    %1041 = vmatprep.subr.mxu0 0.0
    %1042 = vmatpush1.msra.mxu0 0.0
    %1043 = vmatprep.subr.mxu0 0.0
    %1044 = vmatpush1.msra.mxu0 0.0
    %1045 = vmatprep.mubr.f32.mxu0 0.0
    %1046 = vmatmul.mubr.f32.gmra.mrb[0].mxu0 %v972
    %v1047 = vpop.f32.mrb[0].mxu0
    %v1048 = vadd.f32 %v969, %v1047
    %v1049 = vpop.f32.mrb[0].mxu0
    %1050 = vmatprep.mubr.f32.mxu0 0.0
    %1051 = vmatmul.mubr.f32.gmra.mrb[0].mxu0 %v975
    %v1052 = vpop.f32.mrb[0].mxu0
    %v1053 = vadd.f32 %v969, %v1052
    %v1054 = vpop.f32.mrb[0].mxu0
    %1055 = vdwg.mxu0
    %v1056 = vmax.f32 %v1048, 0.0
    %v1057 = vmax.f32 %v1053, 0.0
    %v1058 = vsel %vm888, %v1056, -inf
    %1059 = vmax.xlane.f32.xlu0 %v1058
    %v1060 = vpop.xlane.xlu0 %1059
    %v1061 = vsel %vm888, %v1057, -inf
    %1062 = vmax.xlane.f32.xlu0 %v1061
    %v1063 = vpop.xlane.xlu0 %1062
    %v1064 = vsub.f32 %v1056, %v1060
    %v1065 = vsub.f32 %v1057, %v1063
    %v1066 = vmul.f32 %v1064, 1.442695
    %v1067 = vpow.pop %v1066
    %v1068 = vmul.f32 %v1065, 1.442695
    %v1069 = vpow.pop %v1068
    %v1070 = vsel %vm888, %v1067, 0.0
    %1071 = vadd.xlane.f32.xlu0 %v1070
    %v1072 = vpop.xlane.xlu0 %1071
    %v1073 = vsel %vm888, %v1069, 0.0
    %1074 = vadd.xlane.f32.xlu0 %v1073
    %v1075 = vpop.xlane.xlu0 %1074
    %v1076 = vrcp.pop %v1072
    %v1077 = vrcp.pop %v1075
    %v1078 = vmul.f32 %v1067, %v1076
    %v1079 = vmul.f32 %v1069, %v1077
    %1082 = vrot.lane.b32.xlu0 %v1078, 66
    %v1083 = vpop.permute.xlu0 %1082
    %1084 = vrot.lane.b32.xlu0 %v1079, 66
    %v1085 = vpop.permute.xlu0 %1084
    %vm1088 = vcmask 556560
    %1089 = vst.msk [vmem:[#allocation2] sm:$0xff] %vm1088, %v1083
    %1090 = vst.msk [vmem:[#allocation2 + $0x8] sm:$0xff] %vm1088, %v1085
    %v1091 = vsel %vm888, %v1078, 0
    %v1093 = vsel %vm888, %v1079, 0
    %1095 = vmatprep.subr.mxu0 0.0
    %1096 = vmatpush1.xpose.msra.mxu0 %v1091
    %1097 = vmatprep.subr.mxu0 0.0
    %1098 = vmatpush1.xpose.msra.mxu0 %v1093
    %1099 = vmatprep.subr.mxu0 0.0
    %1100 = vmatpush1.xpose.msra.mxu0 0.0
    %1101 = vmatprep.subr.mxu0 0.0
    %1102 = vmatpush1.xpose.msra.mxu0 0.0
    %1103 = vmatprep.subr.mxu0 0.0
    %1104 = vmatpush1.xpose.msra.mxu0 0.0
    %1105 = vmatprep.subr.mxu0 0.0
    %1106 = vmatpush1.xpose.msra.mxu0 0.0
    %1107 = vmatprep.subr.mxu0 0.0
    %1108 = vmatpush1.xpose.msra.mxu0 0.0
    %1109 = vmatprep.subr.mxu0 0.0
    %1110 = vmatpush1.xpose.msra.mxu0 0.0
    %1111 = vmatprep.subr.mxu0 0.0
    %1112 = vmatpush1.xpose.msra.mxu0 0.0
    %1113 = vmatprep.subr.mxu0 0.0
    %1114 = vmatpush1.xpose.msra.mxu0 0.0
    %1115 = vmatprep.subr.mxu0 0.0
    %1116 = vmatpush1.xpose.msra.mxu0 0.0
    %1117 = vmatprep.subr.mxu0 0.0
    %1118 = vmatpush1.xpose.msra.mxu0 0.0
    %1119 = vmatprep.subr.mxu0 0.0
    %1120 = vmatpush1.xpose.msra.mxu0 0.0
    %1121 = vmatprep.subr.mxu0 0.0
    %1122 = vmatpush1.xpose.msra.mxu0 0.0
    %1123 = vmatprep.subr.mxu0 0.0
    %1124 = vmatpush1.xpose.msra.mxu0 0.0
    %1125 = vmatprep.subr.mxu0 0.0
    %1126 = vmatpush1.xpose.msra.mxu0 0.0
    %1127 = vmatprep.subr.mxu0 0.0
    %1128 = vmatpush1.xpose.msra.mxu0 0.0
    %1129 = vmatprep.subr.mxu0 0.0
    %1130 = vmatpush1.xpose.msra.mxu0 0.0
    %1131 = vmatprep.subr.mxu0 0.0
    %1132 = vmatpush1.xpose.msra.mxu0 0.0
    %1133 = vmatprep.subr.mxu0 0.0
    %1134 = vmatpush1.xpose.msra.mxu0 0.0
    %1135 = vmatprep.subr.mxu0 0.0
    %1136 = vmatpush1.xpose.msra.mxu0 0.0
    %1137 = vmatprep.subr.mxu0 0.0
    %1138 = vmatpush1.xpose.msra.mxu0 0.0
    %1139 = vmatprep.subr.mxu0 0.0
    %1140 = vmatpush1.xpose.msra.mxu0 0.0
    %1141 = vmatprep.subr.mxu0 0.0
    %1142 = vmatpush1.xpose.msra.mxu0 0.0
    %1143 = vmatprep.subr.mxu0 0.0
    %1144 = vmatpush1.xpose.msra.mxu0 0.0
    %1145 = vmatprep.subr.mxu0 0.0
    %1146 = vmatpush1.xpose.msra.mxu0 0.0
    %1147 = vmatprep.subr.mxu0 0.0
    %1148 = vmatpush1.xpose.msra.mxu0 0.0
    %1149 = vmatprep.subr.mxu0 0.0
    %1150 = vmatpush1.xpose.msra.mxu0 0.0
    %1151 = vmatprep.subr.mxu0 0.0
    %1152 = vmatpush1.xpose.msra.mxu0 0.0
    %1153 = vmatprep.subr.mxu0 0.0
    %1154 = vmatpush1.xpose.msra.mxu0 0.0
    %1155 = vmatprep.subr.mxu0 0.0
    %1156 = vmatpush1.xpose.msra.mxu0 0.0
    %1157 = vmatprep.subr.mxu0 0.0
    %1158 = vmatpush1.xpose.msra.mxu0 0.0
    %1159 = vmatprep.mubr.f32.mxu0 0.0
    %1160 = vmatmul.mubr.f32.gmra.mrb[0].mxu0 %v1091
    %v1161 = vpop.f32.mrb[0].mxu0
    %v1162 = vadd.f32 0.0, %v1161
    %v1163 = vpop.f32.mrb[0].mxu0
    %1164 = vmatprep.mubr.f32.mxu0 0.0
    %1165 = vmatmul.mubr.f32.gmra.mrb[0].mxu0 %v1093
    %v1166 = vpop.f32.mrb[0].mxu0
    %v1167 = vadd.f32 0.0, %v1166
    %v1168 = vpop.f32.mrb[0].mxu0
    %1169 = vdwg.mxu0
    %v1170 = vsub.f32 %v1162, %v32
    %v1171 = vsub.f32 %v1167, %v33
    %v1172 = vmul.f32 %v1170, %v1170
    %v1173 = vmul.f32 %v1171, %v1171
    %v1174 = vsel %vm35, %v1172, 0.0
    %v1175 = vsel %vm35, %v1173, 0.0
    %v1176 = vadd.f32 %v1174, %v1175
    %1177 = vadd.xlane.f32.xlu0 %v1176
    %v1178 = vpop.xlane.xlu0 %1177
    %v1179 = vrot.slane %v1178, 4
    %v1180 = vadd.f32 %v1178, %v1179
    %v1181 = vrot.slane %v1180, 2
    %v1182 = vadd.f32 %v1180, %v1181
    %v1183 = vrot.slane %v1182, 1
    %v1184 = vadd.f32 %v1182, %v1183
    %s1185 = vtos %v1184
    %v1186 = vstv %s1185
    %v1187 = vrsqrt.pop %v1186
    %v1188 = vmul.f32 %v1186, %v1187
    %vm1189 = vcmp.eq.f32.partialorder %v1186, inf
    %v1190 = vsel %vm1189, %v1186, %v1188
    %vm1191 = vcmp.eq.f32.partialorder %v1186, 0.0
    %v1192 = vand.u32 %v1186, 2147483648
    %v1193 = vsel %vm1191, %v1192, %v1190
    %v1194 = vsel %vm888, %v1078, -inf
    %1195 = vmax.xlane.f32.xlu0 %v1194
    %v1196 = vpop.xlane.xlu0 %1195
    %v1197 = vsel %vm888, %v1079, -inf
    %1198 = vmax.xlane.f32.xlu0 %v1197
    %v1199 = vpop.xlane.xlu0 %1198
    %v1200 = vsub.f32 %v1078, %v1196
    %v1201 = vsub.f32 %v1079, %v1199
    %v1202 = vmul.f32 %v1200, 1.442695
    %v1203 = vpow.pop %v1202
    %v1204 = vmul.f32 %v1201, 1.442695
    %v1205 = vpow.pop %v1204
    %v1206 = vsel %vm888, %v1203, 0.0
    %1207 = vadd.xlane.f32.xlu0 %v1206
    %v1208 = vpop.xlane.xlu0 %1207
    %v1209 = vsel %vm888, %v1205, 0.0
    %1210 = vadd.xlane.f32.xlu0 %v1209
    %v1211 = vpop.xlane.xlu0 %1210
    %v1212 = vrcp.pop %v1208
    %v1213 = vrcp.pop %v1211
    %v1214 = vmul.f32 %v1203, %v1212
    %v1215 = vmul.f32 %v1205, %v1213
    %v1216 = vsub.f32 0.0, %v1214
    %v1217 = vsub.f32 0.0, %v1215
    %v1218 = vadd.f32 %v1214, 1e-15
    %v1219 = vadd.f32 %v1215, 1e-15
    %v1220 = vlog2.pop %v1218
    %v1221 = vmul.f32 %v1220, 0.6931472
    %v1222 = vlog2.pop %v1219
    %v1223 = vmul.f32 %v1222, 0.6931472
    %v1224 = vmul.f32 %v1216, %v1221
    %v1225 = vmul.f32 %v1217, %v1223
    %v1226 = vsel %vm888, %v1224, 0.0
    %v1227 = vsel %vm888, %v1225, 0.0
    %v1228 = vadd.f32 %v1226, %v1227
    %1229 = vadd.xlane.f32.xlu0 %v1228
    %v1230 = vpop.xlane.xlu0 %1229
    %v1231 = vrot.slane %v1230, 4
    %v1232 = vadd.f32 %v1230, %v1231
    %v1233 = vrot.slane %v1232, 2
    %v1234 = vadd.f32 %v1232, %v1233
    %v1235 = vrot.slane %v1234, 1
    %v1236 = vadd.f32 %v1234, %v1235
    %s1237 = vtos %v1236
    %v1238 = vstv %s1237
    %v1239 = vmul.f32 %v1238, %v302
    %v1240 = vmul.f32 %v30, %v30
    %v1241 = vmul.f32 %v31, %v31
    %v1242 = vsel %vm122, %v1240, 0.0
    %1243 = vadd.xlane.f32.xlu0 %v1242
    %v1244 = vpop.xlane.xlu0 %1243
    %v1245 = vsel %vm122, %v1241, 0.0
    %1246 = vadd.xlane.f32.xlu0 %v1245
    %v1247 = vpop.xlane.xlu0 %1246
    %v1248 = vmax.f32 %v1244, 1e-16
    %v1249 = vmax.f32 %v1247, 1e-16
    %v1250 = vrsqrt.pop %v1248
    %v1251 = vrsqrt.pop %v1249
    %v1252 = vmul.f32 %v30, %v1250
    %v1253 = vmul.f32 %v31, %v1251
    %v1254 = vmul.f32 %v1078, %v1078
    %v1255 = vmul.f32 %v1079, %v1079
    %v1256 = vsel %vm888, %v1254, 0.0
    %1257 = vadd.xlane.f32.xlu0 %v1256
    %v1258 = vpop.xlane.xlu0 %1257
    %v1259 = vsel %vm888, %v1255, 0.0
    %1260 = vadd.xlane.f32.xlu0 %v1259
    %v1261 = vpop.xlane.xlu0 %1260
    %v1262 = vmax.f32 %v1258, 1e-16
    %v1263 = vmax.f32 %v1261, 1e-16
    %v1264 = vrsqrt.pop %v1262
    %v1265 = vrsqrt.pop %v1263
    %v1266 = vmul.f32 %v1078, %v1264
    %v1267 = vmul.f32 %v1079, %v1265
    %v1269 = vsel %vm122, %v1252, 0
    %v1272 = vsel %vm122, %v1253, 0
    %1274 = vmatprep.subr.mxu0 0.0
    %1275 = vmatpush1.xpose.msra.mxu0 %v1269
    %1276 = vmatprep.subr.mxu0 0.0
    %1277 = vmatpush1.xpose.msra.mxu0 %v1272
    %1278 = vmatprep.subr.mxu0 0.0
    %1279 = vmatpush1.xpose.msra.mxu0 0.0
    %1280 = vmatprep.subr.mxu0 0.0
    %1281 = vmatpush1.xpose.msra.mxu0 0.0
    %1282 = vmatprep.subr.mxu0 0.0
    %1283 = vmatpush1.xpose.msra.mxu0 0.0
    %1284 = vmatprep.subr.mxu0 0.0
    %1285 = vmatpush1.xpose.msra.mxu0 0.0
    %1286 = vmatprep.subr.mxu0 0.0
    %1287 = vmatpush1.xpose.msra.mxu0 0.0
    %1288 = vmatprep.subr.mxu0 0.0
    %1289 = vmatpush1.xpose.msra.mxu0 0.0
    %1290 = vmatprep.subr.mxu0 0.0
    %1291 = vmatpush1.xpose.msra.mxu0 0.0
    %1292 = vmatprep.subr.mxu0 0.0
    %1293 = vmatpush1.xpose.msra.mxu0 0.0
    %1294 = vmatprep.subr.mxu0 0.0
    %1295 = vmatpush1.xpose.msra.mxu0 0.0
    %1296 = vmatprep.subr.mxu0 0.0
    %1297 = vmatpush1.xpose.msra.mxu0 0.0
    %1298 = vmatprep.subr.mxu0 0.0
    %1299 = vmatpush1.xpose.msra.mxu0 0.0
    %1300 = vmatprep.subr.mxu0 0.0
    %1301 = vmatpush1.xpose.msra.mxu0 0.0
    %1302 = vmatprep.subr.mxu0 0.0
    %1303 = vmatpush1.xpose.msra.mxu0 0.0
    %1304 = vmatprep.subr.mxu0 0.0
    %1305 = vmatpush1.xpose.msra.mxu0 0.0
    %1306 = vmatprep.subr.mxu0 0.0
    %1307 = vmatpush1.xpose.msra.mxu0 0.0
    %1308 = vmatprep.subr.mxu0 0.0
    %1309 = vmatpush1.xpose.msra.mxu0 0.0
    %1310 = vmatprep.subr.mxu0 0.0
    %1311 = vmatpush1.xpose.msra.mxu0 0.0
    %1312 = vmatprep.subr.mxu0 0.0
    %1313 = vmatpush1.xpose.msra.mxu0 0.0
    %1314 = vmatprep.subr.mxu0 0.0
    %1315 = vmatpush1.xpose.msra.mxu0 0.0
    %1316 = vmatprep.subr.mxu0 0.0
    %1317 = vmatpush1.xpose.msra.mxu0 0.0
    %1318 = vmatprep.subr.mxu0 0.0
    %1319 = vmatpush1.xpose.msra.mxu0 0.0
    %1320 = vmatprep.subr.mxu0 0.0
    %1321 = vmatpush1.xpose.msra.mxu0 0.0
    %1322 = vmatprep.subr.mxu0 0.0
    %1323 = vmatpush1.xpose.msra.mxu0 0.0
    %1324 = vmatprep.subr.mxu0 0.0
    %1325 = vmatpush1.xpose.msra.mxu0 0.0
    %1326 = vmatprep.subr.mxu0 0.0
    %1327 = vmatpush1.xpose.msra.mxu0 0.0
    %1328 = vmatprep.subr.mxu0 0.0
    %1329 = vmatpush1.xpose.msra.mxu0 0.0
    %1330 = vmatprep.subr.mxu0 0.0
    %1331 = vmatpush1.xpose.msra.mxu0 0.0
    %1332 = vmatprep.subr.mxu0 0.0
    %1333 = vmatpush1.xpose.msra.mxu0 0.0
    %1334 = vmatprep.subr.mxu0 0.0
    %1335 = vmatpush1.xpose.msra.mxu0 0.0
    %1336 = vmatprep.subr.mxu0 0.0
    %1337 = vmatpush1.xpose.msra.mxu0 0.0
    %1338 = vmatprep.mubr.f32.mxu0 0.0
    %1339 = vmatmul.mubr.f32.gmra.mrb[0].mxu0 %v1269
    %v1340 = vpop.f32.mrb[0].mxu0
    %v1341 = vadd.f32 0.0, %v1340
    %v1342 = vpop.f32.mrb[0].mxu0
    %1343 = vmatprep.mubr.f32.mxu0 0.0
    %1344 = vmatmul.mubr.f32.gmra.mrb[0].mxu0 %v1272
    %v1345 = vpop.f32.mrb[0].mxu0
    %v1346 = vadd.f32 0.0, %v1345
    %v1347 = vpop.f32.mrb[0].mxu0
    %1348 = vdwg.mxu0
    %v1350 = vsel %vm888, %v1266, 0
    %v1353 = vsel %vm888, %v1267, 0
    %1355 = vmatprep.subr.mxu0 0.0
    %1356 = vmatpush1.xpose.msra.mxu0 %v1350
    %1357 = vmatprep.subr.mxu0 0.0
    %1358 = vmatpush1.xpose.msra.mxu0 %v1353
    %1359 = vmatprep.subr.mxu0 0.0
    %1360 = vmatpush1.xpose.msra.mxu0 0.0
    %1361 = vmatprep.subr.mxu0 0.0
    %1362 = vmatpush1.xpose.msra.mxu0 0.0
    %1363 = vmatprep.subr.mxu0 0.0
    %1364 = vmatpush1.xpose.msra.mxu0 0.0
    %1365 = vmatprep.subr.mxu0 0.0
    %1366 = vmatpush1.xpose.msra.mxu0 0.0
    %1367 = vmatprep.subr.mxu0 0.0
    %1368 = vmatpush1.xpose.msra.mxu0 0.0
    %1369 = vmatprep.subr.mxu0 0.0
    %1370 = vmatpush1.xpose.msra.mxu0 0.0
    %1371 = vmatprep.subr.mxu0 0.0
    %1372 = vmatpush1.xpose.msra.mxu0 0.0
    %1373 = vmatprep.subr.mxu0 0.0
    %1374 = vmatpush1.xpose.msra.mxu0 0.0
    %1375 = vmatprep.subr.mxu0 0.0
    %1376 = vmatpush1.xpose.msra.mxu0 0.0
    %1377 = vmatprep.subr.mxu0 0.0
    %1378 = vmatpush1.xpose.msra.mxu0 0.0
    %1379 = vmatprep.subr.mxu0 0.0
    %1380 = vmatpush1.xpose.msra.mxu0 0.0
    %1381 = vmatprep.subr.mxu0 0.0
    %1382 = vmatpush1.xpose.msra.mxu0 0.0
    %1383 = vmatprep.subr.mxu0 0.0
    %1384 = vmatpush1.xpose.msra.mxu0 0.0
    %1385 = vmatprep.subr.mxu0 0.0
    %1386 = vmatpush1.xpose.msra.mxu0 0.0
    %1387 = vmatprep.subr.mxu0 0.0
    %1388 = vmatpush1.xpose.msra.mxu0 0.0
    %1389 = vmatprep.subr.mxu0 0.0
    %1390 = vmatpush1.xpose.msra.mxu0 0.0
    %1391 = vmatprep.subr.mxu0 0.0
    %1392 = vmatpush1.xpose.msra.mxu0 0.0
    %1393 = vmatprep.subr.mxu0 0.0
    %1394 = vmatpush1.xpose.msra.mxu0 0.0
    %1395 = vmatprep.subr.mxu0 0.0
    %1396 = vmatpush1.xpose.msra.mxu0 0.0
    %1397 = vmatprep.subr.mxu0 0.0
    %1398 = vmatpush1.xpose.msra.mxu0 0.0
    %1399 = vmatprep.subr.mxu0 0.0
    %1400 = vmatpush1.xpose.msra.mxu0 0.0
    %1401 = vmatprep.subr.mxu0 0.0
    %1402 = vmatpush1.xpose.msra.mxu0 0.0
    %1403 = vmatprep.subr.mxu0 0.0
    %1404 = vmatpush1.xpose.msra.mxu0 0.0
    %1405 = vmatprep.subr.mxu0 0.0
    %1406 = vmatpush1.xpose.msra.mxu0 0.0
    %1407 = vmatprep.subr.mxu0 0.0
    %1408 = vmatpush1.xpose.msra.mxu0 0.0
    %1409 = vmatprep.subr.mxu0 0.0
    %1410 = vmatpush1.xpose.msra.mxu0 0.0
    %1411 = vmatprep.subr.mxu0 0.0
    %1412 = vmatpush1.xpose.msra.mxu0 0.0
    %1413 = vmatprep.subr.mxu0 0.0
    %1414 = vmatpush1.xpose.msra.mxu0 0.0
    %1415 = vmatprep.subr.mxu0 0.0
    %1416 = vmatpush1.xpose.msra.mxu0 0.0
    %1417 = vmatprep.subr.mxu0 0.0
    %1418 = vmatpush1.xpose.msra.mxu0 0.0
    %1419 = vmatprep.mubr.f32.mxu0 0.0
    %1420 = vmatmul.mubr.f32.gmra.mrb[0].mxu0 %v1350
    %v1421 = vpop.f32.mrb[0].mxu0
    %v1422 = vadd.f32 0.0, %v1421
    %v1423 = vpop.f32.mrb[0].mxu0
    %1424 = vmatprep.mubr.f32.mxu0 0.0
    %1425 = vmatmul.mubr.f32.gmra.mrb[0].mxu0 %v1353
    %v1426 = vpop.f32.mrb[0].mxu0
    %v1427 = vadd.f32 0.0, %v1426
    %v1428 = vpop.f32.mrb[0].mxu0
    %1429 = vdwg.mxu0
    %v1430 = vmul.f32 %v1341, %v1422
    %v1431 = vmul.f32 %v1346, %v1427
    %v1432 = vsel %vm35, %v1430, 0.0
    %1433 = vadd.xlane.f32.xlu0 %v1432
    %v1434 = vpop.xlane.xlu0 %1433
    %v1435 = vsel %vm35, %v1431, 0.0
    %1436 = vadd.xlane.f32.xlu0 %v1435
    %v1437 = vpop.xlane.xlu0 %1436
    %v1438 = vmul.f32 %v1341, %v1341
    %v1439 = vmul.f32 %v1346, %v1346
    %v1440 = vsel %vm35, %v1438, 0.0
    %1441 = vadd.xlane.f32.xlu0 %v1440
    %v1442 = vpop.xlane.xlu0 %1441
    %v1443 = vsel %vm35, %v1439, 0.0
    %1444 = vadd.xlane.f32.xlu0 %v1443
    %v1445 = vpop.xlane.xlu0 %1444
    %v1446 = vmax.f32 %v1442, 1e-16
    %v1447 = vmax.f32 %v1445, 1e-16
    %v1448 = vrsqrt.pop %v1446
    %v1449 = vrsqrt.pop %v1447
    %v1450 = vmul.f32 %v1434, %v1448
    %v1451 = vmul.f32 %v1437, %v1449
    %v1452 = vmul.f32 %v1422, %v1422
    %v1453 = vmul.f32 %v1427, %v1427
    %v1454 = vsel %vm35, %v1452, 0.0
    %1455 = vadd.xlane.f32.xlu0 %v1454
    %v1456 = vpop.xlane.xlu0 %1455
    %v1457 = vsel %vm35, %v1453, 0.0
    %1458 = vadd.xlane.f32.xlu0 %v1457
    %v1459 = vpop.xlane.xlu0 %1458
    %v1460 = vmax.f32 %v1456, 1e-16
    %v1461 = vmax.f32 %v1459, 1e-16
    %v1462 = vrsqrt.pop %v1460
    %v1463 = vrsqrt.pop %v1461
    %v1464 = vmul.f32 %v1450, %v1462
    %v1465 = vmul.f32 %v1451, %v1463
    %vm1466 = vcmask 7168
    %v1467 = vsel %vm1466, %v1464, 0.0
    %v1468 = vsel %vm1466, %v1465, 0.0
    %v1469 = vadd.f32 %v1467, %v1468
    %1470 = vadd.xlane.f32.xlu0 %v1469
    %v1471 = vpop.xlane.xlu0 %1470
    %v1472 = vrot.slane %v1471, 4
    %v1473 = vadd.f32 %v1471, %v1472
    %v1474 = vrot.slane %v1473, 2
    %v1475 = vadd.f32 %v1473, %v1474
    %v1476 = vrot.slane %v1475, 1
    %v1477 = vadd.f32 %v1475, %v1476
    %s1478 = vtos %v1477
    %v1479 = vstv %s1478
    %v1480 = vsub.f32 0.0, %v1479
    %v1481 = vmul.f32 %v1480, %v302
    %v1482 = vld [vmem:[%s7] sm:$0x7]
    %v1484 = vsel %vm35, %v1482, 0
    %1486 = vmatprep.subr.mxu0 0.0
    %1487 = vmatpush1.msra.mxu0 %v955
    %1488 = vmatprep.subr.mxu0 0.0
    %1489 = vmatpush1.msra.mxu0 %v956
    %1490 = vmatprep.subr.mxu0 0.0
    %1491 = vmatpush1.msra.mxu0 0.0
    %1492 = vmatprep.subr.mxu0 0.0
    %1493 = vmatpush1.msra.mxu0 0.0
    %1494 = vmatprep.subr.mxu0 0.0
    %1495 = vmatpush1.msra.mxu0 0.0
    %1496 = vmatprep.subr.mxu0 0.0
    %1497 = vmatpush1.msra.mxu0 0.0
    %1498 = vmatprep.subr.mxu0 0.0
    %1499 = vmatpush1.msra.mxu0 0.0
    %1500 = vmatprep.subr.mxu0 0.0
    %1501 = vmatpush1.msra.mxu0 0.0
    %1502 = vmatprep.subr.mxu0 0.0
    %1503 = vmatpush1.msra.mxu0 0.0
    %1504 = vmatprep.subr.mxu0 0.0
    %1505 = vmatpush1.msra.mxu0 0.0
    %1506 = vmatprep.subr.mxu0 0.0
    %1507 = vmatpush1.msra.mxu0 0.0
    %1508 = vmatprep.subr.mxu0 0.0
    %1509 = vmatpush1.msra.mxu0 0.0
    %1510 = vmatprep.subr.mxu0 0.0
    %1511 = vmatpush1.msra.mxu0 0.0
    %1512 = vmatprep.subr.mxu0 0.0
    %1513 = vmatpush1.msra.mxu0 0.0
    %1514 = vmatprep.subr.mxu0 0.0
    %1515 = vmatpush1.msra.mxu0 0.0
    %1516 = vmatprep.subr.mxu0 0.0
    %1517 = vmatpush1.msra.mxu0 0.0
    %1518 = vmatprep.subr.mxu0 0.0
    %1519 = vmatpush1.msra.mxu0 0.0
    %1520 = vmatprep.subr.mxu0 0.0
    %1521 = vmatpush1.msra.mxu0 0.0
    %1522 = vmatprep.subr.mxu0 0.0
    %1523 = vmatpush1.msra.mxu0 0.0
    %1524 = vmatprep.subr.mxu0 0.0
    %1525 = vmatpush1.msra.mxu0 0.0
    %1526 = vmatprep.subr.mxu0 0.0
    %1527 = vmatpush1.msra.mxu0 0.0
    %1528 = vmatprep.subr.mxu0 0.0
    %1529 = vmatpush1.msra.mxu0 0.0
    %1530 = vmatprep.subr.mxu0 0.0
    %1531 = vmatpush1.msra.mxu0 0.0
    %1532 = vmatprep.subr.mxu0 0.0
    %1533 = vmatpush1.msra.mxu0 0.0
    %1534 = vmatprep.subr.mxu0 0.0
    %1535 = vmatpush1.msra.mxu0 0.0
    %1536 = vmatprep.subr.mxu0 0.0
    %1537 = vmatpush1.msra.mxu0 0.0
    %1538 = vmatprep.subr.mxu0 0.0
    %1539 = vmatpush1.msra.mxu0 0.0
    %1540 = vmatprep.subr.mxu0 0.0
    %1541 = vmatpush1.msra.mxu0 0.0
    %1542 = vmatprep.subr.mxu0 0.0
    %1543 = vmatpush1.msra.mxu0 0.0
    %1544 = vmatprep.subr.mxu0 0.0
    %1545 = vmatpush1.msra.mxu0 0.0
    %1546 = vmatprep.subr.mxu0 0.0
    %1547 = vmatpush1.msra.mxu0 0.0
    %1548 = vmatprep.subr.mxu0 0.0
    %1549 = vmatpush1.msra.mxu0 0.0
    %1550 = vmatprep.mubr.f32.mxu0 0.0
    %1551 = vmatmul.mubr.f32.gmra.mrb[0].mxu0 %v1484
    %v1552 = vpop.f32.mrb[0].mxu0
    %v1553 = vadd.f32 0.0, %v1552
    %v1554 = vpop.f32.mrb[0].mxu0
    %1555 = vdwg.mxu0
    %v1556 = vand.u32 2147483647, %v1553
    %vm1557 = vcmask 534528
    %v1558 = vsel %vm1557, %v1556, 0.0
    %1559 = vadd.xlane.f32.xlu0 %v1558
    %v1560 = vpop.xlane.xlu0 %1559
    %v1561 = vrot.slane %v1560, 4
    %v1562 = vadd.f32 %v1560, %v1561
    %v1563 = vrot.slane %v1562, 2
    %v1564 = vadd.f32 %v1562, %v1563
    %v1565 = vrot.slane %v1564, 1
    %v1566 = vadd.f32 %v1564, %v1565
    %s1567 = vtos %v1566
    %v1568 = vstv %s1567
    %v1569 = vrcp.pop 3.0
    %v1570 = vmul.f32 %v1568, %v1569
    %v1571 = vmul.f32 %v1193, 100.0
    %v1572 = vmul.f32 %v1239, 10.0
    %v1573 = vadd.f32 %v1571, %v1572
    %v1574 = vmul.f32 %v1481, 100.0
    %v1575 = vadd.f32 %v1573, %v1574
    %v1576 = vadd.f32 %v1575, %v1570
    %vm1577 = vcmask 557600
    %1578 = vst.msk [vmem:[#allocation2] sm:$0x1] %vm1577, %v1193
    %vm1579 = vcmask 565800
    %1580 = vst.msk [vmem:[#allocation2] sm:$0x1] %vm1579, %v1239
    %vm1581 = vcmask 574000
    %1582 = vst.msk [vmem:[#allocation2] sm:$0x1] %vm1581, %v1481
    %vm1583 = vcmask 582200
    %1584 = vst.msk [vmem:[#allocation2] sm:$0x1] %vm1583, %v1570
    %vm1585 = vcmask 590400
    %1586 = vst.msk [vmem:[#allocation2] sm:$0x1] %vm1585, %v1576
    // Predicated region
    $region34: #{tpu_custom_call.1} parent=1 // pred_check
      _
    $region35: #{tpu_custom_call.1} parent=1 // pred_check_branch
      %1588 = sbr.rel (0) target = $region37
    $region36: #{tpu_custom_call.1} parent=1 // pred_region
      %s1590 = ssub.s32 256, 256
      %1591 = vsyncadd [#allocation3], %s1590
      %s1592 = sshll.u32 [#allocation2], 4
      %s1593 = int_to_ptr.vmem [resolvable:$true] %s1592
      %1598 = dma.vmem_to_hbm [thread:$0]  %s1593, 256, %s8, [#allocation3], 128, 128, 8
    $region37: #{tpu_custom_call.1} parent=1 // pred_fallthru
      _
    // Predicated region
    $region38: #{tpu_custom_call.1} parent=1 // pred_check
      _
    $region39: #{tpu_custom_call.1} parent=1 // pred_check_branch
      %1600 = sbr.rel (0) target = $region41
    $region40: #{tpu_custom_call.1} parent=1 // pred_region
      %1601 = dma.done [#allocation3], 256
    $region41: #{tpu_custom_call.1} parent=1 // pred_fallthru
      _
    %1602 = vsyncpa [#allocation3], 1

</llo_original>
